<compile_context>
chip_gen: v6e
topology: v6e:2x2x1
jax: 0.10.0
libtpu: 0.0.40
codegen_flags: <defaults>
</compile_context>

<pallas_src>
import functools

import jax
import jax.numpy as jnp
from jax import lax
from jax.experimental import pallas as pl
from jax.experimental.pallas import tpu as pltpu

LANE = 128
BN_EPS = 1e-5
NEG_SLOPE = 0.2


def _round_up(x, m):
    return (x + m - 1) // m * m


def _cdiv(a, b):
    return -(-a // b)


def _tpu_tuning():
    """Generation-aware tiling / VMEM parameters."""
    try:
        vmem = getattr(pltpu.get_tpu_info(), "vmem_capacity_bytes", 0) or 0
    except Exception:
        vmem = 0
    try:
        kind = jax.devices()[0].device_kind.lower()
    except Exception:
        kind = ""
    # v5e: single vst slot + weakest HBM BW -> only go channel-narrow for ch <= 32.
    narrow_max = 32 if "v5" in kind else 64
    if vmem >= 100 * 1024 * 1024:                  # v5e / v6e: 128 MiB physical VMEM
        return dict(base_tile=512, ew_tile=2048,
                    vmem_limit=64 * 1024 * 1024, mm_budget=48 * 1024 * 1024,
                    narrow_max=narrow_max)
    # v7x (64 MiB physical) or unknown: keep tm=512 when the footprint fits, conservative limit.
    return dict(base_tile=512, ew_tile=1024,
                vmem_limit=40 * 1024 * 1024, mm_budget=26 * 1024 * 1024,
                narrow_max=narrow_max)


def _cap_rows(M, want):
    """Row tile <= want, >=2 tiles when possible (v7x megacore), (8,·)-friendly."""
    if M <= 8:
        return M
    return min(want, max(8, _round_up(_cdiv(M, 2), 8)))


def _pick_m_tile(M, K, Cp, c_store, budget, base_tile):
    tm = _cap_rows(M, base_tile)
    while tm > 8:
        # double-buffered pass-1 footprint: patches + weight + y(bf16) + stats
        fp = 2 * (tm * K * 2 + K * Cp * 2 + tm * c_store * 2 + 2 * c_store * 4)
        if fp <= budget:
            break
        tm = max(8, _round_up(tm // 2, 8))
    return tm


# ---------------------------------------------------------------------------
# Pallas kernels
# ---------------------------------------------------------------------------
def _matmul_stats_kernel(p_ref, w_ref, y_ref, stats_ref, *, tm, m_total, c_store):
    # p: (TM, K) bf16 im2col patches; w: (K, Cp) bf16 (zero-padded lanes for the MXU);
    # y: (TM, c_store) bf16 conv output; stats: (1, 2, c_store) f32 [sum; sum of squares].
    acc = jnp.dot(p_ref[...], w_ref[...], preferred_element_type=jnp.float32)
    y = acc[:, :c_store]                       # drop MXU lane padding before store/stats
    if m_total % tm != 0:
        # Mask the ragged final tile's padding rows out of the BN statistics.
        rows = lax.broadcasted_iota(jnp.int32, (tm, 1), 0) + pl.program_id(0) * tm
        valid = rows < m_total
        ys = jnp.where(valid, y, 0.0)
        ysq = jnp.where(valid, y * y, 0.0)
    else:
        ys = y
        ysq = y * y
    stats_ref[0, 0:1, :] = jnp.sum(ys, axis=0, keepdims=True)
    stats_ref[0, 1:2, :] = jnp.sum(ysq, axis=0, keepdims=True)
    y_ref[...] = y.astype(y_ref.dtype)         # bf16 store (stats taken from f32 acc)


def _norm_lrelu_kernel(y_ref, scale_ref, shift_ref, o_ref):
    # y: (TM, C) bf16; scale/shift: (1, C) f32 folded BN affine; o: (TM, C) bf16.
    y = y_ref[...].astype(jnp.float32) * scale_ref[...] + shift_ref[...]
    o_ref[...] = jnp.where(y >= 0.0, y, NEG_SLOPE * y).astype(o_ref.dtype)


def _linear_kernel(x_ref, w_ref, b_ref, o_ref, acc_ref):
    # Tiled FC: grid = (batch tiles, K tiles); f32 accumulator, bias added on last K step.
    k = pl.program_id(1)

    @pl.when(k == 0)
    def _():
        acc_ref[...] = jnp.zeros_like(acc_ref)

    acc_ref[...] += jnp.dot(x_ref[...], w_ref[...], preferred_element_type=jnp.float32)

    @pl.when(k == pl.num_programs(1) - 1)
    def _():
        o_ref[...] = acc_ref[...] + b_ref[...]


# ---------------------------------------------------------------------------
# Wrappers
# ---------------------------------------------------------------------------
def _im2col_bf16(x, c_real, K=4, stride=2, pad=1):
    """(N,H,W,C_stored) NHWC -> (N*Ho*Wo, K*K*c_real) bf16 patches (real channels only)."""
    N, H, W, _ = x.shape
    xs = x[..., :c_real].astype(jnp.bfloat16)   # no-op when activations are stored narrow
    xp = jnp.pad(xs, ((0, 0), (pad, pad), (pad, pad), (0, 0)))
    Ho = (H + 2 * pad - K) // stride + 1
    Wo = (W + 2 * pad - K) // stride + 1
    cols = []
    for ky in range(K):
        for kx in range(K):
            cols.append(
                xp[:, ky: ky + stride * Ho: stride, kx: kx + stride * Wo: stride, :]
            )
    patches = jnp.concatenate(cols, axis=-1)    # index = ky*K*c + kx*c + ch
    return patches.reshape(N * Ho * Wo, K * K * c_real), Ho, Wo


def conv_bn_lrelu_stage(x, st, tuning):
    N = x.shape[0]
    patches, Ho, Wo = _im2col_bf16(x, st["c_in"])
    M, K = patches.shape
    Cp = st["w"].shape[1]
    cs = st["c_store"]

    tm = _pick_m_tile(M, K, Cp, cs, tuning["mm_budget"], tuning["base_tile"])
    n_tiles = _cdiv(M, tm)
    cparams = pltpu.CompilerParams(
        dimension_semantics=("parallel",), vmem_limit_bytes=tuning["vmem_limit"]
    )

    # Deeper input buffering for the low-arithmetic-intensity (tiny-K) stages (v6e): the MXU
    # finishes each tile faster than the DMA can feed it.  Only when there are enough steps.
    patch_kwargs = {}
    if K <= 512 and n_tiles >= 4:
        patch_kwargs["pipeline_mode"] = pl.Buffered(3)

    # Pass 1: MXU matmul (f32 accumulate) + per-tile BN statistics; y stored bf16, narrow.
    y, stats = pl.pallas_call(
        functools.partial(_matmul_stats_kernel, tm=tm, m_total=M, c_store=cs),
        out_shape=(
            jax.ShapeDtypeStruct((M, cs), jnp.bfloat16),
            jax.ShapeDtypeStruct((n_tiles, 2, cs), jnp.float32),
        ),
        grid=(n_tiles,),
        in_specs=[
            pl.BlockSpec((tm, K), lambda i: (i, 0), **patch_kwargs),
            pl.BlockSpec((K, Cp), lambda i: (0, 0)),   # constant index -> resident weight
        ],
        out_specs=(
            pl.BlockSpec((tm, cs), lambda i: (i, 0)),
            pl.BlockSpec((1, 2, cs), lambda i: (i, 0, 0)),
        ),
        compiler_params=cparams,
    )(patches, st["w"])

    # Tiny cross-tile reduction + fold BN into a single scale/shift (XLA, O(cs) work).
    # Note: E[y^2]-E[y]^2 in f32 is fine at these magnitudes (see review); a Welford-style
    # fold would be the fix if activations ever grow large-mean.
    mean = jnp.sum(stats[:, 0, :], axis=0) / M
    var = jnp.sum(stats[:, 1, :], axis=0) / M - mean * mean
    scale = st["gamma"] * lax.rsqrt(var + BN_EPS)[None, :]
    shift = st["beta"] - mean[None, :] * scale

    # Pass 2: normalize + LeakyReLU — pure streaming, so it gets its own larger tile.
    tm2 = _cap_rows(M, tuning["ew_tile"])
    n2 = _cdiv(M, tm2)
    act = pl.pallas_call(
        _norm_lrelu_kernel,
        out_shape=jax.ShapeDtypeStruct((M, cs), jnp.bfloat16),
        grid=(n2,),
        in_specs=[
            pl.BlockSpec((tm2, cs), lambda i: (i, 0)),
            pl.BlockSpec((1, cs), lambda i: (0, 0)),
            pl.BlockSpec((1, cs), lambda i: (0, 0)),
        ],
        out_specs=pl.BlockSpec((tm2, cs), lambda i: (i, 0)),
        compiler_params=cparams,
    )(y, scale, shift)
    return act.reshape(N, Ho, Wo, cs)


def linear_tiled(feat, w, b, tf, tuning):
    N, F = feat.shape
    Op = w.shape[1]
    tn = N if N <= 256 else 256
    grid = (_cdiv(N, tn), F // tf)
    cparams = pltpu.CompilerParams(
        dimension_semantics=("parallel", "arbitrary"),
        vmem_limit_bytes=tuning["vmem_limit"],
    )
    return pl.pallas_call(
        _linear_kernel,
        out_shape=jax.ShapeDtypeStruct((N, Op), jnp.float32),
        grid=grid,
        in_specs=[
            pl.BlockSpec((tn, tf), lambda i, k: (i, k)),
            pl.BlockSpec((tf, Op), lambda i, k: (k, 0)),
            pl.BlockSpec((1, Op), lambda i, k: (0, 0)),
        ],
        out_specs=pl.BlockSpec((tn, Op), lambda i, k: (i, 0)),
        scratch_shapes=[pltpu.VMEM((tn, Op), jnp.float32)],
        compiler_params=cparams,
    )(feat, w, b)


def encoder_forward(x_nchw, pp, latent_dim, tuning):
    x = jnp.transpose(x_nchw, (0, 2, 3, 1))             # NHWC
    for st in pp["convs"]:
        x = conv_bn_lrelu_stage(x, st, tuning)
    feat = x.reshape(x.shape[0], -1)                     # flatten-permutation folded in fc_w
    f_pad = pp["fc_w"].shape[0]
    if f_pad > feat.shape[1]:
        feat = jnp.pad(feat, ((0, 0), (0, f_pad - feat.shape[1])))
    out = linear_tiled(feat, pp["fc_w"], pp["fc_b"], pp["fc_tf"], tuning)
    out = out[:, : 2 * latent_dim]
    return out[:, :latent_dim], out[:, latent_dim:]


# ---------------------------------------------------------------------------
# Parameters (PyTorch-layout init + conversion to Pallas layout)
# ---------------------------------------------------------------------------
def init_torch_params(key, in_channels, channels, image_size, latent_dim):
    params = {"convs": []}
    cin, hw = in_channels, image_size
    for ch in channels:
        key, kw = jax.random.split(key)
        w = 0.1 * jax.random.normal(kw, (ch, cin, 4, 4), jnp.float32)    # OIHW
        gamma = jnp.ones((ch,), jnp.float32)                             # BN default init
        beta = jnp.zeros((ch,), jnp.float32)
        # Conv2d bias omitted: training-mode BatchNorm cancels it exactly.
        params["convs"].append((w, gamma, beta))
        cin, hw = ch, hw // 2
    num_fc_in = cin * hw * hw
    key, kw, kb = jax.random.split(key, 3)
    params["fc_w"] = 0.05 * jax.random.normal(kw, (2 * latent_dim, num_fc_in), jnp.float32)
    params["fc_b"] = 0.05 * jax.random.normal(kb, (2 * latent_dim,), jnp.float32)
    params["final_hw"] = hw
    return params


def to_pallas_params(tp, in_channels, channels, latent_dim, narrow_max):
    pp = {"convs": []}
    cin = in_channels
    cs_last = None
    for (w, gamma, beta), ch in zip(tp["convs"], channels):
        cp = _round_up(ch, LANE)                                         # MXU lane padding
        # Stored channel count: narrow when the real channel count is small (byte savings
        # dominate the masked-store cost), lane-padded otherwise.
        cs = ch if (ch % LANE == 0 or ch <= narrow_max) else cp
        K = 16 * cin
        w_flat = jnp.transpose(w, (2, 3, 1, 0)).reshape(K, ch)           # matches im2col order
        w_pad = jnp.zeros((K, cp), jnp.float32).at[:, :ch].set(w_flat)
        gamma_s = jnp.zeros((1, cs), jnp.float32).at[0, :ch].set(gamma)
        beta_s = jnp.zeros((1, cs), jnp.float32).at[0, :ch].set(beta)
        pp["convs"].append(dict(w=w_pad.astype(jnp.bfloat16), gamma=gamma_s,
                                beta=beta_s, c_in=cin, c_store=cs))
        cin, cs_last = ch, cs
    # FC: fold NCHW flatten permutation + channel/output padding into the weight matrix.
    hw, c_last = tp["final_hw"], channels[-1]
    out_dim = tp["fc_w"].shape[0]
    op = _round_up(out_dim, LANE)
    w_t = tp["fc_w"].T.reshape(c_last, hw, hw, out_dim)    # torch row = c*H*W + h*W + w
    w_nhwc = jnp.transpose(w_t, (1, 2, 0, 3))              # (h, w, c, out)
    f_store = hw * hw * cs_last
    tf = f_store if f_store <= 2048 else 512               # K tile for the tiled linear
    f_pad = _round_up(f_store, tf)
    fc_w = jnp.zeros((hw, hw, cs_last, op), jnp.float32)
    fc_w = fc_w.at[:, :, :c_last, :out_dim].set(w_nhwc)
    fc_w = fc_w.reshape(f_store, op)
    if f_pad > f_store:
        fc_w = jnp.pad(fc_w, ((0, f_pad - f_store), (0, 0)))
    pp["fc_w"] = fc_w.astype(jnp.bfloat16)
    pp["fc_b"] = jnp.zeros((1, op), jnp.float32).at[0, :out_dim].set(tp["fc_b"])
    pp["fc_tf"] = tf
    return pp


# ---------------------------------------------------------------------------
# Pure-JAX reference (PyTorch semantics; bf16 rounding points matched to the kernels)
# ---------------------------------------------------------------------------
def reference_forward(x_nchw, tp, latent_dim):
    x = x_nchw
    for (w, gamma, beta) in tp["convs"]:
        y = lax.conv_general_dilated(
            x.astype(jnp.bfloat16), w.astype(jnp.bfloat16),
            window_strides=(2, 2), padding=[(1, 1), (1, 1)],
            dimension_numbers=("NCHW", "OIHW", "NCHW"),
            preferred_element_type=jnp.float32)
        mean = jnp.mean(y, axis=(0, 2, 3), keepdims=True)
        var = jnp.mean(jnp.square(y - mean), axis=(0, 2, 3), keepdims=True)
        scale = gamma[None, :, None, None] * lax.rsqrt(var + BN_EPS)
        shift = beta[None, :, None, None] - mean * scale
        yb = y.astype(jnp.bfloat16).astype(jnp.float32)    # mirror kernel's bf16 y store
        yn = yb * scale + shift
        x = jnp.where(yn >= 0.0, yn, NEG_SLOPE * yn).astype(jnp.bfloat16)
    feat = x.reshape(x.shape[0], -1)
    out = jnp.dot(feat, tp["fc_w"].T.astype(jnp.bfloat16),
                  preferred_element_type=jnp.float32) + tp["fc_b"][None, :]
    return out[:, :latent_dim], out[:, latent_dim:]


# ---------------------------------------------------------------------------
if __name__ == "__main__":
    # Small, self-consistent Encoder config.
    in_channels, image_size, latent_dim = 1, 16, 8
    channels = [8, 16, 32]
    batch = 2

    key = jax.random.PRNGKey(0)
    key, kx = jax.random.split(key)
    x = jax.random.normal(kx, (batch, in_channels, image_size, image_size), jnp.float32)

    tparams = init_torch_params(key, in_channels, channels, image_size, latent_dim)
    tuning = _tpu_tuning()
    pparams = to_pallas_params(tparams, in_channels, channels, latent_dim,
                               tuning["narrow_max"])

    fwd = jax.jit(lambda a: encoder_forward(a, pparams, latent_dim, tuning))
    mu, logvar = fwd(x)
    mu = jax.block_until_ready(mu)
    logvar = jax.block_until_ready(logvar)

    mu_ref, logvar_ref = reference_forward(x, tparams, latent_dim)
    assert mu.shape == (batch, latent_dim) and logvar.shape == (batch, latent_dim)
    assert jnp.allclose(mu, mu_ref, atol=2e-2, rtol=2e-2), \
        float(jnp.max(jnp.abs(mu - mu_ref)))
    assert jnp.allclose(logvar, logvar_ref, atol=2e-2, rtol=2e-2), \
        float(jnp.max(jnp.abs(logvar - logvar_ref)))

    print("KERNEL_OK")
</pallas_src>

<mosaic_0001>
module attributes {stable_mosaic.version = 11 : i64} {
  func.func @_matmul_stats_kernel(%arg0: i32, %arg1: memref<64x16xbf16, #tpu.memory_space<vmem>>, %arg2: memref<16x128xbf16, #tpu.memory_space<vmem>>, %arg3: memref<64x8xbf16, #tpu.memory_space<vmem>>, %arg4: memref<1x2x8xf32, #tpu.memory_space<vmem>>) attributes {dimension_semantics = [#tpu.dimension_semantics<parallel>], iteration_bounds = array<i64: 2>, scalar_prefetch = 0 : i64, scratch_operands = 0 : i64, tpu.core_type = #tpu.core_type<tc>, window_params = [{transform_indices = @transform_0, window_bounds = array<i64: 64, 16>}, {pipeline_mode = #tpu.pipeline_mode<synchronous>, transform_indices = @transform_1, window_bounds = array<i64: 16, 128>}, {transform_indices = @transform_2, window_bounds = array<i64: 64, 8>}, {transform_indices = @transform_3, window_bounds = array<i64: 1, 2, 8>}]} {
    %c0 = arith.constant 0 : index
    %c0_0 = arith.constant 0 : index
    %0 = vector.load %arg1[%c0, %c0_0] : memref<64x16xbf16, #tpu.memory_space<vmem>>, vector<64x16xbf16>
    %c0_1 = arith.constant 0 : index
    %c0_2 = arith.constant 0 : index
    %1 = vector.load %arg2[%c0_1, %c0_2] : memref<16x128xbf16, #tpu.memory_space<vmem>>, vector<16x128xbf16>
    %cst = arith.constant dense<0.000000e+00> : vector<64x128xf32>
    %2 = tpu.matmul %0, %1, %cst {dimension_numbers = #tpu.dot_dimension_numbers<[1], [0], [0], [1], [0, 0, 1, 1], [], []>} : vector<64x16xbf16>, vector<16x128xbf16>, vector<64x128xf32> -> vector<64x128xf32>
    %3 = vector.extract_strided_slice %2 {offsets = [0, 0], sizes = [64, 8], strides = [1, 1]} : vector<64x128xf32> to vector<64x8xf32>
    %4 = arith.mulf %3, %3 : vector<64x8xf32>
    %cst_3 = arith.constant dense<0.000000e+00> : vector<8xf32>
    %5 = vector.multi_reduction <add>, %3, %cst_3 [0] : vector<64x8xf32> to vector<8xf32>
    %6 = vector.shape_cast %5 : vector<8xf32> to vector<1x8xf32>
    %c0_4 = arith.constant 0 : index
    %c0_5 = arith.constant 0 : index
    %c0_6 = arith.constant 0 : index
    %7 = vector.load %arg4[%c0_4, %c0_5, %c0_6] : memref<1x2x8xf32, #tpu.memory_space<vmem>>, vector<1x1x8xf32>
    %8 = vector.shape_cast %7 : vector<1x1x8xf32> to vector<1x8xf32>
    %9 = vector.shape_cast %6 : vector<1x8xf32> to vector<1x1x8xf32>
    tpu.vector_store %arg4[%c0_4, %c0_5, %c0_6], %9 {strides = array<i32>} : memref<1x2x8xf32, #tpu.memory_space<vmem>>, vector<1x1x8xf32>,
    %cst_7 = arith.constant dense<0.000000e+00> : vector<8xf32>
    %10 = vector.multi_reduction <add>, %4, %cst_7 [0] : vector<64x8xf32> to vector<8xf32>
    %11 = vector.shape_cast %10 : vector<8xf32> to vector<1x8xf32>
    %c0_8 = arith.constant 0 : index
    %c1 = arith.constant 1 : index
    %c0_9 = arith.constant 0 : index
    %12 = vector.load %arg4[%c0_8, %c1, %c0_9] : memref<1x2x8xf32, #tpu.memory_space<vmem>>, vector<1x1x8xf32>
    %13 = vector.shape_cast %12 : vector<1x1x8xf32> to vector<1x8xf32>
    %14 = vector.shape_cast %11 : vector<1x8xf32> to vector<1x1x8xf32>
    tpu.vector_store %arg4[%c0_8, %c1, %c0_9], %14 {strides = array<i32>} : memref<1x2x8xf32, #tpu.memory_space<vmem>>, vector<1x1x8xf32>,
    %15 = arith.truncf %3 : vector<64x8xf32> to vector<64x8xbf16>
    %c0_10 = arith.constant 0 : index
    %c0_11 = arith.constant 0 : index
    %16 = vector.load %arg3[%c0_10, %c0_11] : memref<64x8xbf16, #tpu.memory_space<vmem>>, vector<64x8xbf16>
    tpu.vector_store %arg3[%c0_10, %c0_11], %15 {strides = array<i32>} : memref<64x8xbf16, #tpu.memory_space<vmem>>, vector<64x8xbf16>,
    return
  }
  func.func @transform_0(%arg0: i32) -> (i32, i32) {
    %c0_i32 = arith.constant 0 : i32
    %c0_i32_0 = arith.constant 0 : i32
    return %arg0, %c0_i32 : i32, i32
  }
  func.func @transform_1(%arg0: i32) -> (i32, i32) {
    %c0_i32 = arith.constant 0 : i32
    %c0_i32_0 = arith.constant 0 : i32
    %c0_i32_1 = arith.constant 0 : i32
    return %c0_i32, %c0_i32_0 : i32, i32
  }
  func.func @transform_2(%arg0: i32) -> (i32, i32) {
    %c0_i32 = arith.constant 0 : i32
    %c0_i32_0 = arith.constant 0 : i32
    return %arg0, %c0_i32 : i32, i32
  }
  func.func @transform_3(%arg0: i32) -> (i32, i32, i32) {
    %c0_i32 = arith.constant 0 : i32
    %c0_i32_0 = arith.constant 0 : i32
    %c0_i32_1 = arith.constant 0 : i32
    return %arg0, %c0_i32, %c0_i32_0 : i32, i32, i32
  }
}

module attributes {stable_mosaic.version = 11 : i64} {
  func.func @_norm_lrelu_kernel(%arg0: i32, %arg1: memref<64x8xbf16, #tpu.memory_space<vmem>>, %arg2: memref<1x8xf32, #tpu.memory_space<vmem>>, %arg3: memref<1x8xf32, #tpu.memory_space<vmem>>, %arg4: memref<64x8xbf16, #tpu.memory_space<vmem>>) attributes {dimension_semantics = [#tpu.dimension_semantics<parallel>], iteration_bounds = array<i64: 2>, scalar_prefetch = 0 : i64, scratch_operands = 0 : i64, tpu.core_type = #tpu.core_type<tc>, window_params = [{transform_indices = @transform_0, window_bounds = array<i64: 64, 8>}, {pipeline_mode = #tpu.pipeline_mode<synchronous>, transform_indices = @transform_1, window_bounds = array<i64: 1, 8>}, {pipeline_mode = #tpu.pipeline_mode<synchronous>, transform_indices = @transform_2, window_bounds = array<i64: 1, 8>}, {transform_indices = @transform_3, window_bounds = array<i64: 64, 8>}]} {
    %c0 = arith.constant 0 : index
    %c0_0 = arith.constant 0 : index
    %0 = vector.load %arg1[%c0, %c0_0] : memref<64x8xbf16, #tpu.memory_space<vmem>>, vector<64x8xbf16>
    %1 = arith.extf %0 : vector<64x8xbf16> to vector<64x8xf32>
    %c0_1 = arith.constant 0 : index
    %c0_2 = arith.constant 0 : index
    %2 = vector.load %arg2[%c0_1, %c0_2] : memref<1x8xf32, #tpu.memory_space<vmem>>, vector<1x8xf32>
    %3 = vector.broadcast %2 : vector<1x8xf32> to vector<64x8xf32>
    %4 = arith.mulf %1, %3 : vector<64x8xf32>
    %c0_3 = arith.constant 0 : index
    %c0_4 = arith.constant 0 : index
    %5 = vector.load %arg3[%c0_3, %c0_4] : memref<1x8xf32, #tpu.memory_space<vmem>>, vector<1x8xf32>
    %6 = vector.broadcast %5 : vector<1x8xf32> to vector<64x8xf32>
    %7 = arith.addf %4, %6 : vector<64x8xf32>
    %cst = arith.constant 0.000000e+00 : f32
    %8 = vector.broadcast %cst : f32 to vector<64x8xf32>
    %9 = arith.cmpf oge, %7, %8 : vector<64x8xf32>
    %cst_5 = arith.constant 2.000000e-01 : f32
    %10 = vector.broadcast %cst_5 : f32 to vector<64x8xf32>
    %11 = arith.mulf %10, %7 : vector<64x8xf32>
    %12 = arith.select %9, %7, %11 : vector<64x8xi1>, vector<64x8xf32>
    %13 = arith.truncf %12 : vector<64x8xf32> to vector<64x8xbf16>
    %c0_6 = arith.constant 0 : index
    %c0_7 = arith.constant 0 : index
    %14 = vector.load %arg4[%c0_6, %c0_7] : memref<64x8xbf16, #tpu.memory_space<vmem>>, vector<64x8xbf16>
    tpu.vector_store %arg4[%c0_6, %c0_7], %13 {strides = array<i32>} : memref<64x8xbf16, #tpu.memory_space<vmem>>, vector<64x8xbf16>,
    return
  }
  func.func @transform_0(%arg0: i32) -> (i32, i32) {
    %c0_i32 = arith.constant 0 : i32
    %c0_i32_0 = arith.constant 0 : i32
    return %arg0, %c0_i32 : i32, i32
  }
  func.func @transform_1(%arg0: i32) -> (i32, i32) {
    %c0_i32 = arith.constant 0 : i32
    %c0_i32_0 = arith.constant 0 : i32
    %c0_i32_1 = arith.constant 0 : i32
    return %c0_i32, %c0_i32_0 : i32, i32
  }
  func.func @transform_2(%arg0: i32) -> (i32, i32) {
    %c0_i32 = arith.constant 0 : i32
    %c0_i32_0 = arith.constant 0 : i32
    %c0_i32_1 = arith.constant 0 : i32
    return %c0_i32, %c0_i32_0 : i32, i32
  }
  func.func @transform_3(%arg0: i32) -> (i32, i32) {
    %c0_i32 = arith.constant 0 : i32
    %c0_i32_0 = arith.constant 0 : i32
    return %arg0, %c0_i32 : i32, i32
  }
}

module attributes {stable_mosaic.version = 11 : i64} {
  func.func @_norm_lrelu_kernel(%arg0: i32, %arg1: memref<16x16xbf16, #tpu.memory_space<vmem>>, %arg2: memref<1x16xf32, #tpu.memory_space<vmem>>, %arg3: memref<1x16xf32, #tpu.memory_space<vmem>>, %arg4: memref<16x16xbf16, #tpu.memory_space<vmem>>) attributes {dimension_semantics = [#tpu.dimension_semantics<parallel>], iteration_bounds = array<i64: 2>, scalar_prefetch = 0 : i64, scratch_operands = 0 : i64, tpu.core_type = #tpu.core_type<tc>, window_params = [{transform_indices = @transform_0, window_bounds = array<i64: 16, 16>}, {pipeline_mode = #tpu.pipeline_mode<synchronous>, transform_indices = @transform_1, window_bounds = array<i64: 1, 16>}, {pipeline_mode = #tpu.pipeline_mode<synchronous>, transform_indices = @transform_2, window_bounds = array<i64: 1, 16>}, {transform_indices = @transform_3, window_bounds = array<i64: 16, 16>}]} {
    %c0 = arith.constant 0 : index
    %c0_0 = arith.constant 0 : index
    %0 = vector.load %arg1[%c0, %c0_0] : memref<16x16xbf16, #tpu.memory_space<vmem>>, vector<16x16xbf16>
    %1 = arith.extf %0 : vector<16x16xbf16> to vector<16x16xf32>
    %c0_1 = arith.constant 0 : index
    %c0_2 = arith.constant 0 : index
    %2 = vector.load %arg2[%c0_1, %c0_2] : memref<1x16xf32, #tpu.memory_space<vmem>>, vector<1x16xf32>
    %3 = vector.broadcast %2 : vector<1x16xf32> to vector<16x16xf32>
    %4 = arith.mulf %1, %3 : vector<16x16xf32>
    %c0_3 = arith.constant 0 : index
    %c0_4 = arith.constant 0 : index
    %5 = vector.load %arg3[%c0_3, %c0_4] : memref<1x16xf32, #tpu.memory_space<vmem>>, vector<1x16xf32>
    %6 = vector.broadcast %5 : vector<1x16xf32> to vector<16x16xf32>
    %7 = arith.addf %4, %6 : vector<16x16xf32>
    %cst = arith.constant 0.000000e+00 : f32
    %8 = vector.broadcast %cst : f32 to vector<16x16xf32>
    %9 = arith.cmpf oge, %7, %8 : vector<16x16xf32>
    %cst_5 = arith.constant 2.000000e-01 : f32
    %10 = vector.broadcast %cst_5 : f32 to vector<16x16xf32>
    %11 = arith.mulf %10, %7 : vector<16x16xf32>
    %12 = arith.select %9, %7, %11 : vector<16x16xi1>, vector<16x16xf32>
    %13 = arith.truncf %12 : vector<16x16xf32> to vector<16x16xbf16>
    %c0_6 = arith.constant 0 : index
    %c0_7 = arith.constant 0 : index
    %14 = vector.load %arg4[%c0_6, %c0_7] : memref<16x16xbf16, #tpu.memory_space<vmem>>, vector<16x16xbf16>
    tpu.vector_store %arg4[%c0_6, %c0_7], %13 {strides = array<i32>} : memref<16x16xbf16, #tpu.memory_space<vmem>>, vector<16x16xbf16>,
    return
  }
  func.func @transform_0(%arg0: i32) -> (i32, i32) {
    %c0_i32 = arith.constant 0 : i32
    %c0_i32_0 = arith.constant 0 : i32
    return %arg0, %c0_i32 : i32, i32
  }
  func.func @transform_1(%arg0: i32) -> (i32, i32) {
    %c0_i32 = arith.constant 0 : i32
    %c0_i32_0 = arith.constant 0 : i32
    %c0_i32_1 = arith.constant 0 : i32
    return %c0_i32, %c0_i32_0 : i32, i32
  }
  func.func @transform_2(%arg0: i32) -> (i32, i32) {
    %c0_i32 = arith.constant 0 : i32
    %c0_i32_0 = arith.constant 0 : i32
    %c0_i32_1 = arith.constant 0 : i32
    return %c0_i32, %c0_i32_0 : i32, i32
  }
  func.func @transform_3(%arg0: i32) -> (i32, i32) {
    %c0_i32 = arith.constant 0 : i32
    %c0_i32_0 = arith.constant 0 : i32
    return %arg0, %c0_i32 : i32, i32
  }
}

module attributes {stable_mosaic.version = 11 : i64} {
  func.func @_matmul_stats_kernel(%arg0: i32, %arg1: memref<16x128xbf16, #tpu.memory_space<vmem>>, %arg2: memref<128x128xbf16, #tpu.memory_space<vmem>>, %arg3: memref<16x16xbf16, #tpu.memory_space<vmem>>, %arg4: memref<1x2x16xf32, #tpu.memory_space<vmem>>) attributes {dimension_semantics = [#tpu.dimension_semantics<parallel>], iteration_bounds = array<i64: 2>, scalar_prefetch = 0 : i64, scratch_operands = 0 : i64, tpu.core_type = #tpu.core_type<tc>, window_params = [{transform_indices = @transform_0, window_bounds = array<i64: 16, 128>}, {pipeline_mode = #tpu.pipeline_mode<synchronous>, transform_indices = @transform_1, window_bounds = array<i64: 128, 128>}, {transform_indices = @transform_2, window_bounds = array<i64: 16, 16>}, {transform_indices = @transform_3, window_bounds = array<i64: 1, 2, 16>}]} {
    %c0 = arith.constant 0 : index
    %c0_0 = arith.constant 0 : index
    %0 = vector.load %arg1[%c0, %c0_0] : memref<16x128xbf16, #tpu.memory_space<vmem>>, vector<16x128xbf16>
    %c0_1 = arith.constant 0 : index
    %c0_2 = arith.constant 0 : index
    %1 = vector.load %arg2[%c0_1, %c0_2] : memref<128x128xbf16, #tpu.memory_space<vmem>>, vector<128x128xbf16>
    %cst = arith.constant dense<0.000000e+00> : vector<16x128xf32>
    %2 = tpu.matmul %0, %1, %cst {dimension_numbers = #tpu.dot_dimension_numbers<[1], [0], [0], [1], [0, 0, 1, 1], [], []>} : vector<16x128xbf16>, vector<128x128xbf16>, vector<16x128xf32> -> vector<16x128xf32>
    %3 = vector.extract_strided_slice %2 {offsets = [0, 0], sizes = [16, 16], strides = [1, 1]} : vector<16x128xf32> to vector<16x16xf32>
    %4 = arith.mulf %3, %3 : vector<16x16xf32>
    %cst_3 = arith.constant dense<0.000000e+00> : vector<16xf32>
    %5 = vector.multi_reduction <add>, %3, %cst_3 [0] : vector<16x16xf32> to vector<16xf32>
    %6 = vector.shape_cast %5 : vector<16xf32> to vector<1x16xf32>
    %c0_4 = arith.constant 0 : index
    %c0_5 = arith.constant 0 : index
    %c0_6 = arith.constant 0 : index
    %7 = vector.load %arg4[%c0_4, %c0_5, %c0_6] : memref<1x2x16xf32, #tpu.memory_space<vmem>>, vector<1x1x16xf32>
    %8 = vector.shape_cast %7 : vector<1x1x16xf32> to vector<1x16xf32>
    %9 = vector.shape_cast %6 : vector<1x16xf32> to vector<1x1x16xf32>
    tpu.vector_store %arg4[%c0_4, %c0_5, %c0_6], %9 {strides = array<i32>} : memref<1x2x16xf32, #tpu.memory_space<vmem>>, vector<1x1x16xf32>,
    %cst_7 = arith.constant dense<0.000000e+00> : vector<16xf32>
    %10 = vector.multi_reduction <add>, %4, %cst_7 [0] : vector<16x16xf32> to vector<16xf32>
    %11 = vector.shape_cast %10 : vector<16xf32> to vector<1x16xf32>
    %c0_8 = arith.constant 0 : index
    %c1 = arith.constant 1 : index
    %c0_9 = arith.constant 0 : index
    %12 = vector.load %arg4[%c0_8, %c1, %c0_9] : memref<1x2x16xf32, #tpu.memory_space<vmem>>, vector<1x1x16xf32>
    %13 = vector.shape_cast %12 : vector<1x1x16xf32> to vector<1x16xf32>
    %14 = vector.shape_cast %11 : vector<1x16xf32> to vector<1x1x16xf32>
    tpu.vector_store %arg4[%c0_8, %c1, %c0_9], %14 {strides = array<i32>} : memref<1x2x16xf32, #tpu.memory_space<vmem>>, vector<1x1x16xf32>,
    %15 = arith.truncf %3 : vector<16x16xf32> to vector<16x16xbf16>
    %c0_10 = arith.constant 0 : index
    %c0_11 = arith.constant 0 : index
    %16 = vector.load %arg3[%c0_10, %c0_11] : memref<16x16xbf16, #tpu.memory_space<vmem>>, vector<16x16xbf16>
    tpu.vector_store %arg3[%c0_10, %c0_11], %15 {strides = array<i32>} : memref<16x16xbf16, #tpu.memory_space<vmem>>, vector<16x16xbf16>,
    return
  }
  func.func @transform_0(%arg0: i32) -> (i32, i32) {
    %c0_i32 = arith.constant 0 : i32
    %c0_i32_0 = arith.constant 0 : i32
    return %arg0, %c0_i32 : i32, i32
  }
  func.func @transform_1(%arg0: i32) -> (i32, i32) {
    %c0_i32 = arith.constant 0 : i32
    %c0_i32_0 = arith.constant 0 : i32
    %c0_i32_1 = arith.constant 0 : i32
    return %c0_i32, %c0_i32_0 : i32, i32
  }
  func.func @transform_2(%arg0: i32) -> (i32, i32) {
    %c0_i32 = arith.constant 0 : i32
    %c0_i32_0 = arith.constant 0 : i32
    return %arg0, %c0_i32 : i32, i32
  }
  func.func @transform_3(%arg0: i32) -> (i32, i32, i32) {
    %c0_i32 = arith.constant 0 : i32
    %c0_i32_0 = arith.constant 0 : i32
    %c0_i32_1 = arith.constant 0 : i32
    return %arg0, %c0_i32, %c0_i32_0 : i32, i32, i32
  }
}

module attributes {stable_mosaic.version = 11 : i64} {
  func.func @_norm_lrelu_kernel(%arg0: i32, %arg1: memref<8x32xbf16, #tpu.memory_space<vmem>>, %arg2: memref<1x32xf32, #tpu.memory_space<vmem>>, %arg3: memref<1x32xf32, #tpu.memory_space<vmem>>, %arg4: memref<8x32xbf16, #tpu.memory_space<vmem>>) attributes {dimension_semantics = [#tpu.dimension_semantics<parallel>], iteration_bounds = array<i64: 1>, scalar_prefetch = 0 : i64, scratch_operands = 0 : i64, tpu.core_type = #tpu.core_type<tc>, window_params = [{transform_indices = @transform_0, window_bounds = array<i64: 8, 32>}, {pipeline_mode = #tpu.pipeline_mode<synchronous>, transform_indices = @transform_1, window_bounds = array<i64: 1, 32>}, {pipeline_mode = #tpu.pipeline_mode<synchronous>, transform_indices = @transform_2, window_bounds = array<i64: 1, 32>}, {transform_indices = @transform_3, window_bounds = array<i64: 8, 32>}]} {
    %c0 = arith.constant 0 : index
    %c0_0 = arith.constant 0 : index
    %0 = vector.load %arg1[%c0, %c0_0] : memref<8x32xbf16, #tpu.memory_space<vmem>>, vector<8x32xbf16>
    %1 = arith.extf %0 : vector<8x32xbf16> to vector<8x32xf32>
    %c0_1 = arith.constant 0 : index
    %c0_2 = arith.constant 0 : index
    %2 = vector.load %arg2[%c0_1, %c0_2] : memref<1x32xf32, #tpu.memory_space<vmem>>, vector<1x32xf32>
    %3 = vector.broadcast %2 : vector<1x32xf32> to vector<8x32xf32>
    %4 = arith.mulf %1, %3 : vector<8x32xf32>
    %c0_3 = arith.constant 0 : index
    %c0_4 = arith.constant 0 : index
    %5 = vector.load %arg3[%c0_3, %c0_4] : memref<1x32xf32, #tpu.memory_space<vmem>>, vector<1x32xf32>
    %6 = vector.broadcast %5 : vector<1x32xf32> to vector<8x32xf32>
    %7 = arith.addf %4, %6 : vector<8x32xf32>
    %cst = arith.constant 0.000000e+00 : f32
    %8 = vector.broadcast %cst : f32 to vector<8x32xf32>
    %9 = arith.cmpf oge, %7, %8 : vector<8x32xf32>
    %cst_5 = arith.constant 2.000000e-01 : f32
    %10 = vector.broadcast %cst_5 : f32 to vector<8x32xf32>
    %11 = arith.mulf %10, %7 : vector<8x32xf32>
    %12 = arith.select %9, %7, %11 : vector<8x32xi1>, vector<8x32xf32>
    %13 = arith.truncf %12 : vector<8x32xf32> to vector<8x32xbf16>
    %c0_6 = arith.constant 0 : index
    %c0_7 = arith.constant 0 : index
    %14 = vector.load %arg4[%c0_6, %c0_7] : memref<8x32xbf16, #tpu.memory_space<vmem>>, vector<8x32xbf16>
    tpu.vector_store %arg4[%c0_6, %c0_7], %13 {strides = array<i32>} : memref<8x32xbf16, #tpu.memory_space<vmem>>, vector<8x32xbf16>,
    return
  }
  func.func @transform_0(%arg0: i32) -> (i32, i32) {
    %c0_i32 = arith.constant 0 : i32
    %c0_i32_0 = arith.constant 0 : i32
    return %arg0, %c0_i32 : i32, i32
  }
  func.func @transform_1(%arg0: i32) -> (i32, i32) {
    %c0_i32 = arith.constant 0 : i32
    %c0_i32_0 = arith.constant 0 : i32
    %c0_i32_1 = arith.constant 0 : i32
    return %c0_i32, %c0_i32_0 : i32, i32
  }
  func.func @transform_2(%arg0: i32) -> (i32, i32) {
    %c0_i32 = arith.constant 0 : i32
    %c0_i32_0 = arith.constant 0 : i32
    %c0_i32_1 = arith.constant 0 : i32
    return %c0_i32, %c0_i32_0 : i32, i32
  }
  func.func @transform_3(%arg0: i32) -> (i32, i32) {
    %c0_i32 = arith.constant 0 : i32
    %c0_i32_0 = arith.constant 0 : i32
    return %arg0, %c0_i32 : i32, i32
  }
}

module attributes {stable_mosaic.version = 11 : i64} {
  func.func @_matmul_stats_kernel(%arg0: i32, %arg1: memref<8x256xbf16, #tpu.memory_space<vmem>>, %arg2: memref<256x128xbf16, #tpu.memory_space<vmem>>, %arg3: memref<8x32xbf16, #tpu.memory_space<vmem>>, %arg4: memref<1x2x32xf32, #tpu.memory_space<vmem>>) attributes {dimension_semantics = [#tpu.dimension_semantics<parallel>], iteration_bounds = array<i64: 1>, scalar_prefetch = 0 : i64, scratch_operands = 0 : i64, tpu.core_type = #tpu.core_type<tc>, window_params = [{transform_indices = @transform_0, window_bounds = array<i64: 8, 256>}, {pipeline_mode = #tpu.pipeline_mode<synchronous>, transform_indices = @transform_1, window_bounds = array<i64: 256, 128>}, {transform_indices = @transform_2, window_bounds = array<i64: 8, 32>}, {transform_indices = @transform_3, window_bounds = array<i64: 1, 2, 32>}]} {
    %c0 = arith.constant 0 : index
    %c0_0 = arith.constant 0 : index
    %0 = vector.load %arg1[%c0, %c0_0] : memref<8x256xbf16, #tpu.memory_space<vmem>>, vector<8x256xbf16>
    %c0_1 = arith.constant 0 : index
    %c0_2 = arith.constant 0 : index
    %1 = vector.load %arg2[%c0_1, %c0_2] : memref<256x128xbf16, #tpu.memory_space<vmem>>, vector<256x128xbf16>
    %cst = arith.constant dense<0.000000e+00> : vector<8x128xf32>
    %2 = tpu.matmul %0, %1, %cst {dimension_numbers = #tpu.dot_dimension_numbers<[1], [0], [0], [1], [0, 0, 1, 1], [], []>} : vector<8x256xbf16>, vector<256x128xbf16>, vector<8x128xf32> -> vector<8x128xf32>
    %3 = vector.extract_strided_slice %2 {offsets = [0, 0], sizes = [8, 32], strides = [1, 1]} : vector<8x128xf32> to vector<8x32xf32>
    %4 = arith.mulf %3, %3 : vector<8x32xf32>
    %cst_3 = arith.constant dense<0.000000e+00> : vector<32xf32>
    %5 = vector.multi_reduction <add>, %3, %cst_3 [0] : vector<8x32xf32> to vector<32xf32>
    %6 = vector.shape_cast %5 : vector<32xf32> to vector<1x32xf32>
    %c0_4 = arith.constant 0 : index
    %c0_5 = arith.constant 0 : index
    %c0_6 = arith.constant 0 : index
    %7 = vector.load %arg4[%c0_4, %c0_5, %c0_6] : memref<1x2x32xf32, #tpu.memory_space<vmem>>, vector<1x1x32xf32>
    %8 = vector.shape_cast %7 : vector<1x1x32xf32> to vector<1x32xf32>
    %9 = vector.shape_cast %6 : vector<1x32xf32> to vector<1x1x32xf32>
    tpu.vector_store %arg4[%c0_4, %c0_5, %c0_6], %9 {strides = array<i32>} : memref<1x2x32xf32, #tpu.memory_space<vmem>>, vector<1x1x32xf32>,
    %cst_7 = arith.constant dense<0.000000e+00> : vector<32xf32>
    %10 = vector.multi_reduction <add>, %4, %cst_7 [0] : vector<8x32xf32> to vector<32xf32>
    %11 = vector.shape_cast %10 : vector<32xf32> to vector<1x32xf32>
    %c0_8 = arith.constant 0 : index
    %c1 = arith.constant 1 : index
    %c0_9 = arith.constant 0 : index
    %12 = vector.load %arg4[%c0_8, %c1, %c0_9] : memref<1x2x32xf32, #tpu.memory_space<vmem>>, vector<1x1x32xf32>
    %13 = vector.shape_cast %12 : vector<1x1x32xf32> to vector<1x32xf32>
    %14 = vector.shape_cast %11 : vector<1x32xf32> to vector<1x1x32xf32>
    tpu.vector_store %arg4[%c0_8, %c1, %c0_9], %14 {strides = array<i32>} : memref<1x2x32xf32, #tpu.memory_space<vmem>>, vector<1x1x32xf32>,
    %15 = arith.truncf %3 : vector<8x32xf32> to vector<8x32xbf16>
    %c0_10 = arith.constant 0 : index
    %c0_11 = arith.constant 0 : index
    %16 = vector.load %arg3[%c0_10, %c0_11] : memref<8x32xbf16, #tpu.memory_space<vmem>>, vector<8x32xbf16>
    tpu.vector_store %arg3[%c0_10, %c0_11], %15 {strides = array<i32>} : memref<8x32xbf16, #tpu.memory_space<vmem>>, vector<8x32xbf16>,
    return
  }
  func.func @transform_0(%arg0: i32) -> (i32, i32) {
    %c0_i32 = arith.constant 0 : i32
    %c0_i32_0 = arith.constant 0 : i32
    return %arg0, %c0_i32 : i32, i32
  }
  func.func @transform_1(%arg0: i32) -> (i32, i32) {
    %c0_i32 = arith.constant 0 : i32
    %c0_i32_0 = arith.constant 0 : i32
    %c0_i32_1 = arith.constant 0 : i32
    return %c0_i32, %c0_i32_0 : i32, i32
  }
  func.func @transform_2(%arg0: i32) -> (i32, i32) {
    %c0_i32 = arith.constant 0 : i32
    %c0_i32_0 = arith.constant 0 : i32
    return %arg0, %c0_i32 : i32, i32
  }
  func.func @transform_3(%arg0: i32) -> (i32, i32, i32) {
    %c0_i32 = arith.constant 0 : i32
    %c0_i32_0 = arith.constant 0 : i32
    %c0_i32_1 = arith.constant 0 : i32
    return %arg0, %c0_i32, %c0_i32_0 : i32, i32, i32
  }
}

module attributes {stable_mosaic.version = 11 : i64} {
  func.func @_linear_kernel(%arg0: i32, %arg1: i32, %arg2: memref<2x128xbf16, #tpu.memory_space<vmem>>, %arg3: memref<128x128xbf16, #tpu.memory_space<vmem>>, %arg4: memref<1x128xf32, #tpu.memory_space<vmem>>, %arg5: memref<2x128xf32, #tpu.memory_space<vmem>>, %arg6: memref<2x128xf32, #tpu.memory_space<vmem>>) attributes {dimension_semantics = [#tpu.dimension_semantics<parallel>, #tpu.dimension_semantics<arbitrary>], iteration_bounds = array<i64: 1, 1>, scalar_prefetch = 0 : i64, scratch_operands = 1 : i64, tpu.core_type = #tpu.core_type<tc>, window_params = [{transform_indices = @transform_0, window_bounds = array<i64: 2, 128>}, {transform_indices = @transform_1, window_bounds = array<i64: 128, 128>}, {pipeline_mode = #tpu.pipeline_mode<synchronous>, transform_indices = @transform_2, window_bounds = array<i64: 1, 128>}, {transform_indices = @transform_3, window_bounds = array<i64: 2, 128>}]} {
    %c0_i32 = arith.constant 0 : i32
    %0 = arith.cmpi eq, %arg1, %c0_i32 : i32
    %1 = arith.extui %0 : i1 to i32
    %c0_i32_0 = arith.constant 0 : i32
    %2 = arith.cmpi ne, %1, %c0_i32_0 : i32
    scf.if %2 {
      %cst_10 = arith.constant 0.000000e+00 : f32
      %12 = vector.broadcast %cst_10 : f32 to vector<2x128xf32>
      %c0_11 = arith.constant 0 : index
      %c0_12 = arith.constant 0 : index
      %13 = vector.load %arg6[%c0_11, %c0_12] : memref<2x128xf32, #tpu.memory_space<vmem>>, vector<2x128xf32>
      tpu.vector_store %arg6[%c0_11, %c0_12], %12 {strides = array<i32>} : memref<2x128xf32, #tpu.memory_space<vmem>>, vector<2x128xf32>,
    } else {
    }
    %c0 = arith.constant 0 : index
    %c0_1 = arith.constant 0 : index
    %3 = vector.load %arg6[%c0, %c0_1] : memref<2x128xf32, #tpu.memory_space<vmem>>, vector<2x128xf32>
    %c0_2 = arith.constant 0 : index
    %c0_3 = arith.constant 0 : index
    %4 = vector.load %arg2[%c0_2, %c0_3] : memref<2x128xbf16, #tpu.memory_space<vmem>>, vector<2x128xbf16>
    %c0_4 = arith.constant 0 : index
    %c0_5 = arith.constant 0 : index
    %5 = vector.load %arg3[%c0_4, %c0_5] : memref<128x128xbf16, #tpu.memory_space<vmem>>, vector<128x128xbf16>
    %cst = arith.constant dense<0.000000e+00> : vector<2x128xf32>
    %6 = tpu.matmul %4, %5, %cst {dimension_numbers = #tpu.dot_dimension_numbers<[1], [0], [0], [1], [0, 0, 1, 1], [], []>} : vector<2x128xbf16>, vector<128x128xbf16>, vector<2x128xf32> -> vector<2x128xf32>
    %7 = arith.addf %3, %6 : vector<2x128xf32>
    %c0_6 = arith.constant 0 : index
    %c0_7 = arith.constant 0 : index
    %8 = vector.load %arg6[%c0_6, %c0_7] : memref<2x128xf32, #tpu.memory_space<vmem>>, vector<2x128xf32>
    tpu.vector_store %arg6[%c0_6, %c0_7], %7 {strides = array<i32>} : memref<2x128xf32, #tpu.memory_space<vmem>>, vector<2x128xf32>,
    %c0_i32_8 = arith.constant 0 : i32
    %9 = arith.cmpi eq, %arg1, %c0_i32_8 : i32
    %10 = arith.extui %9 : i1 to i32
    %c0_i32_9 = arith.constant 0 : i32
    %11 = arith.cmpi ne, %10, %c0_i32_9 : i32
    scf.if %11 {
      %c0_10 = arith.constant 0 : index
      %c0_11 = arith.constant 0 : index
      %12 = vector.load %arg6[%c0_10, %c0_11] : memref<2x128xf32, #tpu.memory_space<vmem>>, vector<2x128xf32>
      %c0_12 = arith.constant 0 : index
      %c0_13 = arith.constant 0 : index
      %13 = vector.load %arg4[%c0_12, %c0_13] : memref<1x128xf32, #tpu.memory_space<vmem>>, vector<1x128xf32>
      %14 = vector.broadcast %13 : vector<1x128xf32> to vector<2x128xf32>
      %15 = arith.addf %12, %14 : vector<2x128xf32>
      %c0_14 = arith.constant 0 : index
      %c0_15 = arith.constant 0 : index
      %16 = vector.load %arg5[%c0_14, %c0_15] : memref<2x128xf32, #tpu.memory_space<vmem>>, vector<2x128xf32>
      tpu.vector_store %arg5[%c0_14, %c0_15], %15 {strides = array<i32>} : memref<2x128xf32, #tpu.memory_space<vmem>>, vector<2x128xf32>,
    } else {
    }
    return
  }
  func.func @transform_0(%arg0: i32, %arg1: i32) -> (i32, i32) {
    %c0_i32 = arith.constant 0 : i32
    return %arg0, %arg1 : i32, i32
  }
  func.func @transform_1(%arg0: i32, %arg1: i32) -> (i32, i32) {
    %c0_i32 = arith.constant 0 : i32
    %c0_i32_0 = arith.constant 0 : i32
    return %arg1, %c0_i32 : i32, i32
  }
  func.func @transform_2(%arg0: i32, %arg1: i32) -> (i32, i32) {
    %c0_i32 = arith.constant 0 : i32
    %c0_i32_0 = arith.constant 0 : i32
    %c0_i32_1 = arith.constant 0 : i32
    return %c0_i32, %c0_i32_0 : i32, i32
  }
  func.func @transform_3(%arg0: i32, %arg1: i32) -> (i32, i32) {
    %c0_i32 = arith.constant 0 : i32
    %c0_i32_0 = arith.constant 0 : i32
    return %arg0, %c0_i32 : i32, i32
  }
}

</mosaic_0001>

<llo_original>
// kernel: _lambda_.8
$region0: #{_lambda_.8}
  #allocation0 [shape = 'u32[]', space=smem, size = 0x4, offset = 0x4, fixed_abs, tag = 'smem constant byte address 0x4 - core index']
  #allocation1 [shape = 'u32[144,128]{1,0:T(1,128)}', space=vmem, size = 0x12000, scoped, tag = 'internal scratch']
  %s0 = inlined_call_operand.vmem [shape: bf16[128,8], index: 0, kind: input, shape index: {}]
  %s1 = inlined_call_operand.vmem [shape: f32[1,8], index: 1, kind: input, shape index: {}]
  %s2 = inlined_call_operand.vmem [shape: f32[1,8], index: 2, kind: input, shape index: {}]
  %s3 = inlined_call_operand.vmem [shape: bf16[128,8], index: 3, kind: output, shape index: {}]
  %s4 = sld [smem:[#allocation0]]
  $region45: #{_lambda_.8} parent=0
    _
  %s6 = ssub.s32 1, %s4
  %s7 = scalar_select 0, %s6, %s4
  loop: start=0, step=1, limit=4
  $region2: #{_lambda_.8} parent=0 // loop_pre_header
    _
  $region3: #{_lambda_.8} parent=0 // loop_header
    %s9 = sphi 0, %s13
    %p10 = scmp.ge.s32.totalorder %s9, 4
    %s19 = sphi 0, %s21
    %s22 = sphi 0, %s19
    %s23 = sphi 0, %s22
    %s39 = sphi 0, %s23
    %s43 = sphi 0, %s43
    %s45 = sphi 0, %s43
    %s46 = sphi 0, %s45
    %s60 = sphi 0, %s46
    %s64 = sphi 0, %s64
    %s66 = sphi 0, %s64
    %s67 = sphi 0, %s66
    %s81 = sphi 0, %s67
    %s87 = sphi 0, %s89
    %s90 = sphi 0, %s87
    %s91 = sphi 0, %s90
    %s107 = sphi 0, %s91
  $region4: #{_lambda_.8} parent=0 // loop_header_branch
    %12 = sbr.rel (%p10) target = $region8
  $region5: #{_lambda_.8} parent=0 // loop_body
    %s14 = ssub.s32 %s9, 1
    %s15 = ssub.s32 %s9, 2
    %s16 = sadd.s32 %s9, 1
    %s17 = ssub.s32 %s9, %s16
    %p18 = scmp.eq.s32.totalorder %s17, 0
    %s20 = sadd.s32 %s19, 1
    %s21 = scalar_select %p18, %s19, %s20
    %p24 = pneg %p18
    %p25 = scmp.eq.s32.totalorder %s9, 1
    %p26 = por %p24, %p25
    %p27 = scmp.ne.s32.totalorder %s19, %s22
    %p28 = scmp.eq.s32.totalorder %s9, 0
    %p29 = por %p27, %p28
    %p30 = scmp.ne.s32.totalorder %s19, %s22
    %p31 = scmp.eq.s32.totalorder %s14, 1
    %p32 = por %p30, %p31
    %p33 = scmp.ne.s32.totalorder %s22, %s23
    %p34 = scmp.eq.s32.totalorder %s14, 0
    %p35 = por %p33, %p34
    %p36 = scmp.ne.s32.totalorder %s22, %s23
    %p37 = scmp.eq.s32.totalorder %s15, 1
    %p38 = por %p36, %p37
    %p40 = scmp.ne.s32.totalorder %s23, %s39
    %p41 = scmp.eq.s32.totalorder %s15, 0
    %p42 = por %p40, %p41
    %s44 = sadd.s32 %s43, 1
    %p47 = scmp.eq.s32.totalorder %s9, 1
    %p48 = scmp.ne.s32.totalorder %s43, %s45
    %p49 = scmp.eq.s32.totalorder %s9, 0
    %p50 = por %p48, %p49
    %p51 = scmp.ne.s32.totalorder %s43, %s45
    %p52 = scmp.eq.s32.totalorder %s14, 1
    %p53 = por %p51, %p52
    %p54 = scmp.ne.s32.totalorder %s45, %s46
    %p55 = scmp.eq.s32.totalorder %s14, 0
    %p56 = por %p54, %p55
    %p57 = scmp.ne.s32.totalorder %s45, %s46
    %p58 = scmp.eq.s32.totalorder %s15, 1
    %p59 = por %p57, %p58
    %p61 = scmp.ne.s32.totalorder %s46, %s60
    %p62 = scmp.eq.s32.totalorder %s15, 0
    %p63 = por %p61, %p62
    %s65 = sadd.s32 %s64, 1
    %p68 = scmp.eq.s32.totalorder %s9, 1
    %p69 = scmp.ne.s32.totalorder %s64, %s66
    %p70 = scmp.eq.s32.totalorder %s9, 0
    %p71 = por %p69, %p70
    %p72 = scmp.ne.s32.totalorder %s64, %s66
    %p73 = scmp.eq.s32.totalorder %s14, 1
    %p74 = por %p72, %p73
    %p75 = scmp.ne.s32.totalorder %s66, %s67
    %p76 = scmp.eq.s32.totalorder %s14, 0
    %p77 = por %p75, %p76
    %p78 = scmp.ne.s32.totalorder %s66, %s67
    %p79 = scmp.eq.s32.totalorder %s15, 1
    %p80 = por %p78, %p79
    %p82 = scmp.ne.s32.totalorder %s67, %s81
    %p83 = scmp.eq.s32.totalorder %s15, 0
    %p84 = por %p82, %p83
    %s85 = ssub.s32 %s9, %s16
    %p86 = scmp.eq.s32.totalorder %s85, 0
    %s88 = sadd.s32 %s87, 1
    %s89 = scalar_select %p86, %s87, %s88
    %p92 = pneg %p86
    %p93 = scmp.eq.s32.totalorder %s9, 1
    %p94 = por %p92, %p93
    %p95 = scmp.ne.s32.totalorder %s87, %s90
    %p96 = scmp.eq.s32.totalorder %s9, 0
    %p97 = por %p95, %p96
    %p98 = scmp.ne.s32.totalorder %s87, %s90
    %p99 = scmp.eq.s32.totalorder %s14, 1
    %p100 = por %p98, %p99
    %p101 = scmp.ne.s32.totalorder %s90, %s91
    %p102 = scmp.eq.s32.totalorder %s14, 0
    %p103 = por %p101, %p102
    %p104 = scmp.ne.s32.totalorder %s90, %s91
    %p105 = scmp.eq.s32.totalorder %s15, 1
    %p106 = por %p104, %p105
    %p108 = scmp.ne.s32.totalorder %s91, %s107
    %p109 = scmp.eq.s32.totalorder %s15, 0
    %p110 = por %p108, %p109
    %p111 = scmp.le.s32.totalorder 1, %s9
    %p112 = scmp.lt.s32.totalorder %s9, 3
    %p113 = pnand %p111, %p112
    %p114 = pneg %p113
    // Predicated region
    $region9: #{_lambda_.8} parent=5 // pred_check
      _
    $region10: #{_lambda_.8} parent=5 // pred_check_branch
      %116 = sbr.rel (%p113) target = $region12
    $region11: #{_lambda_.8} parent=5 // pred_region
      %s117 = ssub.s32 %s9, 1
      // Predicated region
      $region13: #{_lambda_.8} parent=11 // pred_check
        %p118 = pneg %p56
      $region14: #{_lambda_.8} parent=11 // pred_check_branch
        %120 = sbr.rel (%p118) target = $region16
      $region15: #{_lambda_.8} parent=11 // pred_region
        _
      $region16: #{_lambda_.8} parent=11 // pred_fallthru
        _
      // Predicated region
      $region17: #{_lambda_.8} parent=11 // pred_check
        %p121 = pneg %p77
      $region18: #{_lambda_.8} parent=11 // pred_check_branch
        %123 = sbr.rel (%p121) target = $region20
      $region19: #{_lambda_.8} parent=11 // pred_region
        _
      $region20: #{_lambda_.8} parent=11 // pred_fallthru
        _
    $region12: #{_lambda_.8} parent=5 // pred_fallthru
      _
    %p124 = scmp.lt.s32.totalorder %s9, 2
    // Predicated region
    $region21: #{_lambda_.8} parent=5 // pred_check
      %p125 = pneg %p124
    $region22: #{_lambda_.8} parent=5 // pred_check_branch
      %127 = sbr.rel (%p125) target = $region24
    $region23: #{_lambda_.8} parent=5 // pred_region
      // Predicated region
      $region25: #{_lambda_.8} parent=23 // pred_check
        %p128 = pneg %p29
      $region26: #{_lambda_.8} parent=23 // pred_check_branch
        %130 = sbr.rel (%p128) target = $region28
      $region27: #{_lambda_.8} parent=23 // pred_region
        %s131 = smul.u32 8, %s9
        %p132 = scmp.lt.s32.totalorder %s131, 15
        %s133 = scalar_select %p132, %s131, 15
        %s134 = smul.addr %s133, 4
        %s135 = scalar_lea.vmem %s0, %s134
        %s136 = smul.u32 8, %s9
      $region28: #{_lambda_.8} parent=23 // pred_fallthru
        _
    $region24: #{_lambda_.8} parent=5 // pred_fallthru
      _
    %p137 = scmp.le.s32.totalorder 1, %s9
    %p138 = scmp.lt.s32.totalorder %s9, 3
    %p139 = pnand %p137, %p138
    %p140 = pneg %p139
    // Predicated region
    $region29: #{_lambda_.8} parent=5 // pred_check
      _
    $region30: #{_lambda_.8} parent=5 // pred_check_branch
      %142 = sbr.rel (%p139) target = $region32
    $region31: #{_lambda_.8} parent=5 // pred_region
      %s143 = ssub.s32 %s9, 1
      %s144 = smul.u32 8, %s14
      %p145 = scmp.lt.s32.totalorder %s144, 15
      %s146 = scalar_select %p145, %s144, 15
      %s147 = smul.addr %s146, 4
      %s148 = scalar_lea.vmem %s0, %s147
      %p149 = pneg %p35
      %p150 = pneg %p32
      %p151 = pneg %p56
      %p152 = pneg %p53
      %p153 = pneg %p77
      %p154 = pneg %p74
      %p155 = pneg %p103
      %p156 = pneg %p100
      %s157 = smul.u32 8, %s14
      %p158 = scmp.lt.s32.totalorder %s157, 15
      %s159 = scalar_select %p158, %s157, 15
      %s160 = smul.addr %s159, 4
      %s161 = scalar_lea.vmem %s3, %s160
      %s162 = smul.u32 8, %s14
      %p163 = scmp.lt.s32.totalorder %s162, 15
      %s164 = scalar_select %p163, %s162, 15
      %s165 = smul.addr %s164, 4
      %s166 = scalar_lea.vmem %s0, %s165
      %s167 = smul.u32 8, %s14
      %s168 = smul.u32 8, %s14
      %p169 = scmp.lt.s32.totalorder %s168, 15
      %s170 = scalar_select %p169, %s168, 15
      %s171 = smul.addr %s170, 4
      %s172 = scalar_lea.vmem %s3, %s171
      %s173 = smul.u32 8, %s14
      %v174 = vld [vmem:[%s166] sm:$0xf]
      %v175 = vld [vmem:[%s166 + $0x4] sm:$0xf]
      %v176 = vld [vmem:[%s166 + $0x8] sm:$0xf]
      %v177 = vld [vmem:[%s166 + $0xc] sm:$0xf]
      %v178 = vld [vmem:[%s166 + $0x10] sm:$0xf]
      %v179 = vld [vmem:[%s166 + $0x14] sm:$0xf]
      %v180 = vld [vmem:[%s166 + $0x18] sm:$0xf]
      %v181 = vld [vmem:[%s166 + $0x1c] sm:$0xf]
      %v182 = vunpack.c.l.bf16 %v174
      %v183 = vunpack.c.l.bf16 %v175
      %v184 = vunpack.c.l.bf16 %v176
      %v185 = vunpack.c.l.bf16 %v177
      %v186 = vunpack.c.l.bf16 %v178
      %v187 = vunpack.c.l.bf16 %v179
      %v188 = vunpack.c.l.bf16 %v180
      %v189 = vunpack.c.l.bf16 %v181
      %v190 = vld [vmem:[%s1] sm:$0x1]
      %v192 = vlaneseq
      %v193 = vshrl.u32 %v192, 7
      %v194 = vsub.s32 0, %v193
      %v195 = vrot.slane %v190, %v194
      %v197 = vmul.f32 %v182, %v195
      %v198 = vmul.f32 %v183, %v195
      %v199 = vmul.f32 %v184, %v195
      %v200 = vmul.f32 %v185, %v195
      %v201 = vmul.f32 %v186, %v195
      %v202 = vmul.f32 %v187, %v195
      %v203 = vmul.f32 %v188, %v195
      %v204 = vmul.f32 %v189, %v195
      %v205 = vld [vmem:[%s2] sm:$0x1]
      %v207 = vlaneseq
      %v208 = vshrl.u32 %v207, 7
      %v209 = vsub.s32 0, %v208
      %v210 = vrot.slane %v205, %v209
      %v212 = vadd.f32 %v197, %v210
      %v213 = vadd.f32 %v198, %v210
      %v214 = vadd.f32 %v199, %v210
      %v215 = vadd.f32 %v200, %v210
      %v216 = vadd.f32 %v201, %v210
      %v217 = vadd.f32 %v202, %v210
      %v218 = vadd.f32 %v203, %v210
      %v219 = vadd.f32 %v204, %v210
      %vm220 = vcmp.ge.f32.partialorder %v212, 0.0
      %vm221 = vcmp.ge.f32.partialorder %v213, 0.0
      %vm222 = vcmp.ge.f32.partialorder %v214, 0.0
      %vm223 = vcmp.ge.f32.partialorder %v215, 0.0
      %vm224 = vcmp.ge.f32.partialorder %v216, 0.0
      %vm225 = vcmp.ge.f32.partialorder %v217, 0.0
      %vm226 = vcmp.ge.f32.partialorder %v218, 0.0
      %vm227 = vcmp.ge.f32.partialorder %v219, 0.0
      %v228 = vmul.f32 %v212, 0.2
      %v229 = vmul.f32 %v213, 0.2
      %v230 = vmul.f32 %v214, 0.2
      %v231 = vmul.f32 %v215, 0.2
      %v232 = vmul.f32 %v216, 0.2
      %v233 = vmul.f32 %v217, 0.2
      %v234 = vmul.f32 %v218, 0.2
      %v235 = vmul.f32 %v219, 0.2
      %v236 = vsel %vm220, %v212, %v228
      %v237 = vsel %vm221, %v213, %v229
      %v238 = vsel %vm222, %v214, %v230
      %v239 = vsel %vm223, %v215, %v231
      %v240 = vsel %vm224, %v216, %v232
      %v241 = vsel %vm225, %v217, %v233
      %v242 = vsel %vm226, %v218, %v234
      %v243 = vsel %vm227, %v219, %v235
      %v244 = vpack.c.bf16 %v237, %v236
      %v245 = vpack.c.bf16 %v239, %v238
      %v246 = vpack.c.bf16 %v241, %v240
      %v247 = vpack.c.bf16 %v243, %v242
      %v252 = vunpack.c.l.b16 %v244
      %v253 = vunpack.c.h.b16 %v244
      %v254 = vunpack.c.l.b16 %v245
      %v255 = vunpack.c.h.b16 %v245
      %v256 = vunpack.c.l.b16 %v246
      %v257 = vunpack.c.h.b16 %v246
      %v258 = vunpack.c.l.b16 %v247
      %v259 = vunpack.c.h.b16 %v247
      %v260 = vpack.c.b16 %v252, %v252
      %v261 = vpack.c.b16 %v253, %v253
      %v262 = vpack.c.b16 %v254, %v254
      %v263 = vpack.c.b16 %v255, %v255
      %v264 = vpack.c.b16 %v256, %v256
      %v265 = vpack.c.b16 %v257, %v257
      %v266 = vpack.c.b16 %v258, %v258
      %v267 = vpack.c.b16 %v259, %v259
      %vm276 = vcmask 60416
      %277 = vst.msk [vmem:[%s172] sm:$0xf] %vm276, %v260
      %278 = vst.msk [vmem:[%s172 + $0x4] sm:$0xf] %vm276, %v261
      %279 = vst.msk [vmem:[%s172 + $0x8] sm:$0xf] %vm276, %v262
      %280 = vst.msk [vmem:[%s172 + $0xc] sm:$0xf] %vm276, %v263
      %281 = vst.msk [vmem:[%s172 + $0x10] sm:$0xf] %vm276, %v264
      %282 = vst.msk [vmem:[%s172 + $0x14] sm:$0xf] %vm276, %v265
      %283 = vst.msk [vmem:[%s172 + $0x18] sm:$0xf] %vm276, %v266
      %284 = vst.msk [vmem:[%s172 + $0x1c] sm:$0xf] %vm276, %v267
      %s285 = smul.u32 8, %s14
      %p286 = scmp.lt.s32.totalorder %s285, 15
      %s287 = scalar_select %p286, %s285, 15
      %s288 = smul.addr %s287, 4
      %s289 = scalar_lea.vmem %s3, %s288
      // Predicated region
      $region33: #{_lambda_.8} parent=31 // pred_check
        %p290 = pneg %p100
      $region34: #{_lambda_.8} parent=31 // pred_check_branch
        %292 = sbr.rel (%p290) target = $region36
      $region35: #{_lambda_.8} parent=31 // pred_region
        %s293 = smul.u32 8, %s14
      $region36: #{_lambda_.8} parent=31 // pred_fallthru
        _
    $region32: #{_lambda_.8} parent=5 // pred_fallthru
      _
    %p294 = scmp.le.s32.totalorder 2, %s9
    // Predicated region
    $region37: #{_lambda_.8} parent=5 // pred_check
      %p295 = pneg %p294
    $region38: #{_lambda_.8} parent=5 // pred_check_branch
      %297 = sbr.rel (%p295) target = $region40
    $region39: #{_lambda_.8} parent=5 // pred_region
      %s298 = ssub.s32 %s9, 2
      // Predicated region
      $region41: #{_lambda_.8} parent=39 // pred_check
        %p299 = pneg %p106
      $region42: #{_lambda_.8} parent=39 // pred_check_branch
        %301 = sbr.rel (%p299) target = $region44
      $region43: #{_lambda_.8} parent=39 // pred_region
        %s302 = smul.u32 8, %s15
        %p303 = scmp.lt.s32.totalorder %s302, 15
        %s304 = scalar_select %p303, %s302, 15
        %s305 = smul.addr %s304, 4
        %s306 = scalar_lea.vmem %s3, %s305
      $region44: #{_lambda_.8} parent=39 // pred_fallthru
        _
    $region40: #{_lambda_.8} parent=5 // pred_fallthru
      _
  $region6: #{_lambda_.8} parent=0 // loop_footer
    %s13 = sadd.s32 1, %s9
  $region7: #{_lambda_.8} parent=0 // loop_footer_branch
    %8 = sbr.rel target = $region3
  $region8: #{_lambda_.8} parent=0 // loop_exit
    _

// kernel: _lambda_.7
$region0: #{_lambda_.7}
  #allocation0 [shape = 'u32[]', space=smem, size = 0x4, offset = 0x4, fixed_abs, tag = 'smem constant byte address 0x4 - core index']
  #allocation1 [shape = 'u32[144,128]{1,0:T(1,128)}', space=vmem, size = 0x12000, scoped, tag = 'internal scratch']
  %s0 = inlined_call_operand.vmem [shape: bf16[128,16], index: 0, kind: input, shape index: {}]
  %s1 = inlined_call_operand.vmem [shape: bf16[16,128], index: 1, kind: input, shape index: {}]
  %s2 = inlined_call_operand.vmem [shape: bf16[128,8], index: 2, kind: output, shape index: {0}]
  %s3 = inlined_call_operand.vmem [shape: f32[2,2,8], index: 3, kind: output, shape index: {1}]
  %4 = xla_tuple %s2, %s3
  %s5 = sld [smem:[#allocation0]]
  $region49: #{_lambda_.7} parent=0
    _
  %s7 = ssub.s32 1, %s5
  %s8 = scalar_select 0, %s7, %s5
  loop: start=0, step=1, limit=4
  $region2: #{_lambda_.7} parent=0 // loop_pre_header
    _
  $region3: #{_lambda_.7} parent=0 // loop_header
    %s10 = sphi 0, %s14
    %p11 = scmp.ge.s32.totalorder %s10, 4
    %s20 = sphi 0, %s22
    %s23 = sphi 0, %s20
    %s24 = sphi 0, %s23
    %s40 = sphi 0, %s24
    %s44 = sphi 0, %s44
    %s46 = sphi 0, %s44
    %s47 = sphi 0, %s46
    %s61 = sphi 0, %s47
    %s67 = sphi 0, %s69
    %s70 = sphi 0, %s67
    %s71 = sphi 0, %s70
    %s87 = sphi 0, %s71
    %s93 = sphi 0, %s95
    %s96 = sphi 0, %s93
    %s97 = sphi 0, %s96
    %s113 = sphi 0, %s97
  $region4: #{_lambda_.7} parent=0 // loop_header_branch
    %13 = sbr.rel (%p11) target = $region8
  $region5: #{_lambda_.7} parent=0 // loop_body
    %s15 = ssub.s32 %s10, 1
    %s16 = ssub.s32 %s10, 2
    %s17 = sadd.s32 %s10, 1
    %s18 = ssub.s32 %s10, %s17
    %p19 = scmp.eq.s32.totalorder %s18, 0
    %s21 = sadd.s32 %s20, 1
    %s22 = scalar_select %p19, %s20, %s21
    %p25 = pneg %p19
    %p26 = scmp.eq.s32.totalorder %s10, 1
    %p27 = por %p25, %p26
    %p28 = scmp.ne.s32.totalorder %s20, %s23
    %p29 = scmp.eq.s32.totalorder %s10, 0
    %p30 = por %p28, %p29
    %p31 = scmp.ne.s32.totalorder %s20, %s23
    %p32 = scmp.eq.s32.totalorder %s15, 1
    %p33 = por %p31, %p32
    %p34 = scmp.ne.s32.totalorder %s23, %s24
    %p35 = scmp.eq.s32.totalorder %s15, 0
    %p36 = por %p34, %p35
    %p37 = scmp.ne.s32.totalorder %s23, %s24
    %p38 = scmp.eq.s32.totalorder %s16, 1
    %p39 = por %p37, %p38
    %p41 = scmp.ne.s32.totalorder %s24, %s40
    %p42 = scmp.eq.s32.totalorder %s16, 0
    %p43 = por %p41, %p42
    %s45 = sadd.s32 %s44, 1
    %p48 = scmp.eq.s32.totalorder %s10, 1
    %p49 = scmp.ne.s32.totalorder %s44, %s46
    %p50 = scmp.eq.s32.totalorder %s10, 0
    %p51 = por %p49, %p50
    %p52 = scmp.ne.s32.totalorder %s44, %s46
    %p53 = scmp.eq.s32.totalorder %s15, 1
    %p54 = por %p52, %p53
    %p55 = scmp.ne.s32.totalorder %s46, %s47
    %p56 = scmp.eq.s32.totalorder %s15, 0
    %p57 = por %p55, %p56
    %p58 = scmp.ne.s32.totalorder %s46, %s47
    %p59 = scmp.eq.s32.totalorder %s16, 1
    %p60 = por %p58, %p59
    %p62 = scmp.ne.s32.totalorder %s47, %s61
    %p63 = scmp.eq.s32.totalorder %s16, 0
    %p64 = por %p62, %p63
    %s65 = ssub.s32 %s10, %s17
    %p66 = scmp.eq.s32.totalorder %s65, 0
    %s68 = sadd.s32 %s67, 1
    %s69 = scalar_select %p66, %s67, %s68
    %p72 = pneg %p66
    %p73 = scmp.eq.s32.totalorder %s10, 1
    %p74 = por %p72, %p73
    %p75 = scmp.ne.s32.totalorder %s67, %s70
    %p76 = scmp.eq.s32.totalorder %s10, 0
    %p77 = por %p75, %p76
    %p78 = scmp.ne.s32.totalorder %s67, %s70
    %p79 = scmp.eq.s32.totalorder %s15, 1
    %p80 = por %p78, %p79
    %p81 = scmp.ne.s32.totalorder %s70, %s71
    %p82 = scmp.eq.s32.totalorder %s15, 0
    %p83 = por %p81, %p82
    %p84 = scmp.ne.s32.totalorder %s70, %s71
    %p85 = scmp.eq.s32.totalorder %s16, 1
    %p86 = por %p84, %p85
    %p88 = scmp.ne.s32.totalorder %s71, %s87
    %p89 = scmp.eq.s32.totalorder %s16, 0
    %p90 = por %p88, %p89
    %s91 = ssub.s32 %s10, %s17
    %p92 = scmp.eq.s32.totalorder %s91, 0
    %s94 = sadd.s32 %s93, 1
    %s95 = scalar_select %p92, %s93, %s94
    %p98 = pneg %p92
    %p99 = scmp.eq.s32.totalorder %s10, 1
    %p100 = por %p98, %p99
    %p101 = scmp.ne.s32.totalorder %s93, %s96
    %p102 = scmp.eq.s32.totalorder %s10, 0
    %p103 = por %p101, %p102
    %p104 = scmp.ne.s32.totalorder %s93, %s96
    %p105 = scmp.eq.s32.totalorder %s15, 1
    %p106 = por %p104, %p105
    %p107 = scmp.ne.s32.totalorder %s96, %s97
    %p108 = scmp.eq.s32.totalorder %s15, 0
    %p109 = por %p107, %p108
    %p110 = scmp.ne.s32.totalorder %s96, %s97
    %p111 = scmp.eq.s32.totalorder %s16, 1
    %p112 = por %p110, %p111
    %p114 = scmp.ne.s32.totalorder %s97, %s113
    %p115 = scmp.eq.s32.totalorder %s16, 0
    %p116 = por %p114, %p115
    %p117 = scmp.le.s32.totalorder 1, %s10
    %p118 = scmp.lt.s32.totalorder %s10, 3
    %p119 = pnand %p117, %p118
    %p120 = pneg %p119
    // Predicated region
    $region9: #{_lambda_.7} parent=5 // pred_check
      _
    $region10: #{_lambda_.7} parent=5 // pred_check_branch
      %122 = sbr.rel (%p119) target = $region12
    $region11: #{_lambda_.7} parent=5 // pred_region
      %s123 = ssub.s32 %s10, 1
      // Predicated region
      $region13: #{_lambda_.7} parent=11 // pred_check
        %p124 = pneg %p57
      $region14: #{_lambda_.7} parent=11 // pred_check_branch
        %126 = sbr.rel (%p124) target = $region16
      $region15: #{_lambda_.7} parent=11 // pred_region
        _
      $region16: #{_lambda_.7} parent=11 // pred_fallthru
        _
    $region12: #{_lambda_.7} parent=5 // pred_fallthru
      _
    %p127 = scmp.lt.s32.totalorder %s10, 2
    // Predicated region
    $region17: #{_lambda_.7} parent=5 // pred_check
      %p128 = pneg %p127
    $region18: #{_lambda_.7} parent=5 // pred_check_branch
      %130 = sbr.rel (%p128) target = $region20
    $region19: #{_lambda_.7} parent=5 // pred_region
      // Predicated region
      $region21: #{_lambda_.7} parent=19 // pred_check
        %p131 = pneg %p30
      $region22: #{_lambda_.7} parent=19 // pred_check_branch
        %133 = sbr.rel (%p131) target = $region24
      $region23: #{_lambda_.7} parent=19 // pred_region
        %s134 = smul.u32 8, %s10
        %p135 = scmp.lt.s32.totalorder %s134, 15
        %s136 = scalar_select %p135, %s134, 15
        %s137 = smul.addr %s136, 4
        %s138 = scalar_lea.vmem %s0, %s137
        %s139 = smul.u32 8, %s10
      $region24: #{_lambda_.7} parent=19 // pred_fallthru
        _
    $region20: #{_lambda_.7} parent=5 // pred_fallthru
      _
    %p140 = scmp.le.s32.totalorder 1, %s10
    %p141 = scmp.lt.s32.totalorder %s10, 3
    %p142 = pnand %p140, %p141
    %p143 = pneg %p142
    // Predicated region
    $region25: #{_lambda_.7} parent=5 // pred_check
      _
    $region26: #{_lambda_.7} parent=5 // pred_check_branch
      %145 = sbr.rel (%p142) target = $region28
    $region27: #{_lambda_.7} parent=5 // pred_region
      %s146 = ssub.s32 %s10, 1
      %s147 = smul.u32 8, %s15
      %p148 = scmp.lt.s32.totalorder %s147, 15
      %s149 = scalar_select %p148, %s147, 15
      %s150 = smul.addr %s149, 4
      %s151 = scalar_lea.vmem %s0, %s150
      %p152 = pneg %p36
      %p153 = pneg %p33
      %p154 = pneg %p57
      %p155 = pneg %p54
      %p156 = pneg %p83
      %p157 = pneg %p80
      %s158 = smul.u32 8, %s15
      %p159 = scmp.lt.s32.totalorder %s158, 15
      %s160 = scalar_select %p159, %s158, 15
      %s161 = smul.addr %s160, 4
      %s162 = scalar_lea.vmem %s2, %s161
      %p163 = pneg %p109
      %p164 = pneg %p106
      %p165 = scmp.lt.s32.totalorder %s15, 1
      %s166 = scalar_select %p165, %s15, 1
      %s167 = smul.addr %s166, 2
      %s168 = scalar_lea.vmem %s3, %s167
      %s169 = smul.u32 8, %s15
      %p170 = scmp.lt.s32.totalorder %s169, 15
      %s171 = scalar_select %p170, %s169, 15
      %s172 = smul.addr %s171, 4
      %s173 = scalar_lea.vmem %s0, %s172
      %s174 = smul.u32 8, %s15
      %s175 = smul.u32 8, %s15
      %p176 = scmp.lt.s32.totalorder %s175, 15
      %s177 = scalar_select %p176, %s175, 15
      %s178 = smul.addr %s177, 4
      %s179 = scalar_lea.vmem %s2, %s178
      %s180 = smul.u32 8, %s15
      %p181 = scmp.lt.s32.totalorder %s15, 1
      %s182 = scalar_select %p181, %s15, 1
      %s183 = smul.addr %s182, 2
      %s184 = scalar_lea.vmem %s3, %s183
      %v186 = vld [vmem:[%s173] sm:$0xf]
      %v187 = vld [vmem:[%s173 + $0x4] sm:$0xf]
      %v188 = vld [vmem:[%s173 + $0x8] sm:$0xf]
      %v189 = vld [vmem:[%s173 + $0xc] sm:$0xf]
      %v190 = vld [vmem:[%s173 + $0x10] sm:$0xf]
      %v191 = vld [vmem:[%s173 + $0x14] sm:$0xf]
      %v192 = vld [vmem:[%s173 + $0x18] sm:$0xf]
      %v193 = vld [vmem:[%s173 + $0x1c] sm:$0xf]
      %v194 = vld [vmem:[%s1] sm:$0xf]
      %v195 = vld [vmem:[%s1 + $0x4] sm:$0xf]
      %v204 = vunpack.c.l.b16 %v186
      %v205 = vunpack.c.l.b16 %v187
      %v206 = vunpack.c.l.b16 %v188
      %v207 = vunpack.c.l.b16 %v189
      %v208 = vunpack.c.l.b16 %v190
      %v209 = vunpack.c.l.b16 %v191
      %v210 = vunpack.c.l.b16 %v192
      %v211 = vunpack.c.l.b16 %v193
      %v212 = vpack.c.b16 %v205, %v204
      %v213 = vpack.c.b16 %v207, %v206
      %v214 = vpack.c.b16 %v209, %v208
      %v215 = vpack.c.b16 %v211, %v210
      %v218 = vunpack.c.l.b16 %v194
      %v219 = vunpack.c.l.b16 %v195
      %v220 = vpack.c.b16 %v219, %v218
      %vm222 = vcmask 130048
      %v224 = vsel %vm222, %v212, 0
      %v227 = vsel %vm222, %v213, 0
      %v230 = vsel %vm222, %v214, 0
      %v233 = vsel %vm222, %v215, 0
      %235 = vmatprep.subr.bf16.mxu0 0
      %236 = vmatpush1.bf16.msra.mxu0 0
      %237 = vmatprep.subr.bf16.mxu0 0
      %238 = vmatpush1.bf16.msra.mxu0 0
      %239 = vmatprep.subr.bf16.mxu0 0
      %240 = vmatpush1.bf16.msra.mxu0 0
      %241 = vmatprep.subr.bf16.mxu0 0
      %242 = vmatpush1.bf16.msra.mxu0 0
      %243 = vmatprep.subr.bf16.mxu0 0
      %244 = vmatpush1.bf16.msra.mxu0 0
      %245 = vmatprep.subr.bf16.mxu0 0
      %246 = vmatpush1.bf16.msra.mxu0 0
      %247 = vmatprep.subr.bf16.mxu0 0
      %248 = vmatpush1.bf16.msra.mxu0 0
      %249 = vmatprep.subr.bf16.mxu0 0
      %250 = vmatpush1.bf16.msra.mxu0 %v220
      %251 = vmatprep.subr.bf16.mxu0 0
      %252 = vmatpush2.bf16.msra.mxu0 0
      %253 = vmatprep.subr.bf16.mxu0 0
      %254 = vmatpush2.bf16.msra.mxu0 0
      %255 = vmatprep.subr.bf16.mxu0 0
      %256 = vmatpush2.bf16.msra.mxu0 0
      %257 = vmatprep.subr.bf16.mxu0 0
      %258 = vmatpush2.bf16.msra.mxu0 0
      %259 = vmatprep.subr.bf16.mxu0 0
      %260 = vmatpush2.bf16.msra.mxu0 0
      %261 = vmatprep.subr.bf16.mxu0 0
      %262 = vmatpush2.bf16.msra.mxu0 0
      %263 = vmatprep.subr.bf16.mxu0 0
      %264 = vmatpush2.bf16.msra.mxu0 0
      %265 = vmatprep.subr.bf16.mxu0 0
      %266 = vmatpush2.bf16.msra.mxu0 0
      %267 = vmatprep.mubr.bf16.mxu0 0
      %268 = vmatmul.mubr.bf16.gmra.mxu0 %v224
      %v269 = vpop.f32.mrf.mxu0
      %v270 = vadd.f32 0.0, %v269
      %v271 = vpop.f32.mrf.mxu0
      %v272 = vpop.f32.mrf.mxu0
      %v273 = vadd.f32 0.0, %v272
      %v274 = vpop.f32.mrf.mxu0
      %275 = vmatprep.mubr.bf16.mxu0 0
      %276 = vmatmul.mubr.bf16.gmra.mxu0 %v227
      %v277 = vpop.f32.mrf.mxu0
      %v278 = vadd.f32 0.0, %v277
      %v279 = vpop.f32.mrf.mxu0
      %v280 = vpop.f32.mrf.mxu0
      %v281 = vadd.f32 0.0, %v280
      %v282 = vpop.f32.mrf.mxu0
      %283 = vmatprep.mubr.bf16.mxu0 0
      %284 = vmatmul.mubr.bf16.gmra.mxu0 %v230
      %v285 = vpop.f32.mrf.mxu0
      %v286 = vadd.f32 0.0, %v285
      %v287 = vpop.f32.mrf.mxu0
      %v288 = vpop.f32.mrf.mxu0
      %v289 = vadd.f32 0.0, %v288
      %v290 = vpop.f32.mrf.mxu0
      %291 = vmatprep.mubr.bf16.mxu0 0
      %292 = vmatmul.mubr.bf16.gmra.mxu0 %v233
      %v293 = vpop.f32.mrf.mxu0
      %v294 = vadd.f32 0.0, %v293
      %v295 = vpop.f32.mrf.mxu0
      %v296 = vpop.f32.mrf.mxu0
      %v297 = vadd.f32 0.0, %v296
      %v298 = vpop.f32.mrf.mxu0
      %299 = vdwg.mxu0
      %v300 = vmul.f32 %v270, %v270
      %v301 = vmul.f32 %v273, %v273
      %v302 = vmul.f32 %v278, %v278
      %v303 = vmul.f32 %v281, %v281
      %v304 = vmul.f32 %v286, %v286
      %v305 = vmul.f32 %v289, %v289
      %v306 = vmul.f32 %v294, %v294
      %v307 = vmul.f32 %v297, %v297
      %vm308 = vcmask 64512
      %v309 = vsel %vm308, %v270, 0.0
      %v310 = vsel %vm308, %v273, 0.0
      %v311 = vadd.f32 %v309, %v310
      %v312 = vsel %vm308, %v278, 0.0
      %v313 = vadd.f32 %v311, %v312
      %v314 = vsel %vm308, %v281, 0.0
      %v315 = vadd.f32 %v313, %v314
      %v316 = vsel %vm308, %v286, 0.0
      %v317 = vadd.f32 %v315, %v316
      %v318 = vsel %vm308, %v289, 0.0
      %v319 = vadd.f32 %v317, %v318
      %v320 = vsel %vm308, %v294, 0.0
      %v321 = vadd.f32 %v319, %v320
      %v322 = vsel %vm308, %v297, 0.0
      %v323 = vadd.f32 %v321, %v322
      %v324 = vrot.slane %v323, 4
      %v325 = vadd.f32 %v323, %v324
      %v326 = vrot.slane %v325, 2
      %v327 = vadd.f32 %v325, %v326
      %v328 = vrot.slane %v327, 1
      %v329 = vadd.f32 %v327, %v328
      %vm330 = vcmask 57344
      %331 = vst.msk [vmem:[%s184] sm:$0x1] %vm330, %v329
      %v332 = vsel %vm308, %v300, 0.0
      %v333 = vsel %vm308, %v301, 0.0
      %v334 = vadd.f32 %v332, %v333
      %v335 = vsel %vm308, %v302, 0.0
      %v336 = vadd.f32 %v334, %v335
      %v337 = vsel %vm308, %v303, 0.0
      %v338 = vadd.f32 %v336, %v337
      %v339 = vsel %vm308, %v304, 0.0
      %v340 = vadd.f32 %v338, %v339
      %v341 = vsel %vm308, %v305, 0.0
      %v342 = vadd.f32 %v340, %v341
      %v343 = vsel %vm308, %v306, 0.0
      %v344 = vadd.f32 %v342, %v343
      %v345 = vsel %vm308, %v307, 0.0
      %v346 = vadd.f32 %v344, %v345
      %v347 = vrot.slane %v346, 4
      %v348 = vadd.f32 %v346, %v347
      %v349 = vrot.slane %v348, 2
      %v350 = vadd.f32 %v348, %v349
      %v351 = vrot.slane %v350, 1
      %v352 = vadd.f32 %v350, %v351
      %353 = vst.msk [vmem:[%s184 + $0x1] sm:$0x1] %vm330, %v352
      %v354 = vpack.c.bf16 %v273, %v270
      %v355 = vpack.c.bf16 %v281, %v278
      %v356 = vpack.c.bf16 %v289, %v286
      %v357 = vpack.c.bf16 %v297, %v294
      %v362 = vunpack.c.l.b16 %v354
      %v363 = vunpack.c.h.b16 %v354
      %v364 = vunpack.c.l.b16 %v355
      %v365 = vunpack.c.h.b16 %v355
      %v366 = vunpack.c.l.b16 %v356
      %v367 = vunpack.c.h.b16 %v356
      %v368 = vunpack.c.l.b16 %v357
      %v369 = vunpack.c.h.b16 %v357
      %v370 = vpack.c.b16 %v362, %v362
      %v371 = vpack.c.b16 %v363, %v363
      %v372 = vpack.c.b16 %v364, %v364
      %v373 = vpack.c.b16 %v365, %v365
      %v374 = vpack.c.b16 %v366, %v366
      %v375 = vpack.c.b16 %v367, %v367
      %v376 = vpack.c.b16 %v368, %v368
      %v377 = vpack.c.b16 %v369, %v369
      %vm386 = vcmask 60416
      %387 = vst.msk [vmem:[%s179] sm:$0xf] %vm386, %v370
      %388 = vst.msk [vmem:[%s179 + $0x4] sm:$0xf] %vm386, %v371
      %389 = vst.msk [vmem:[%s179 + $0x8] sm:$0xf] %vm386, %v372
      %390 = vst.msk [vmem:[%s179 + $0xc] sm:$0xf] %vm386, %v373
      %391 = vst.msk [vmem:[%s179 + $0x10] sm:$0xf] %vm386, %v374
      %392 = vst.msk [vmem:[%s179 + $0x14] sm:$0xf] %vm386, %v375
      %393 = vst.msk [vmem:[%s179 + $0x18] sm:$0xf] %vm386, %v376
      %394 = vst.msk [vmem:[%s179 + $0x1c] sm:$0xf] %vm386, %v377
      %s395 = smul.u32 8, %s15
      %p396 = scmp.lt.s32.totalorder %s395, 15
      %s397 = scalar_select %p396, %s395, 15
      %s398 = smul.addr %s397, 4
      %s399 = scalar_lea.vmem %s2, %s398
      %p400 = scmp.lt.s32.totalorder %s15, 1
      %s401 = scalar_select %p400, %s15, 1
      %s402 = smul.addr %s401, 2
      %s403 = scalar_lea.vmem %s3, %s402
      // Predicated region
      $region29: #{_lambda_.7} parent=27 // pred_check
        %p404 = pneg %p80
      $region30: #{_lambda_.7} parent=27 // pred_check_branch
        %406 = sbr.rel (%p404) target = $region32
      $region31: #{_lambda_.7} parent=27 // pred_region
        %s407 = smul.u32 8, %s15
      $region32: #{_lambda_.7} parent=27 // pred_fallthru
        _
      // Predicated region
      $region33: #{_lambda_.7} parent=27 // pred_check
        %p408 = pneg %p106
      $region34: #{_lambda_.7} parent=27 // pred_check_branch
        %410 = sbr.rel (%p408) target = $region36
      $region35: #{_lambda_.7} parent=27 // pred_region
        _
      $region36: #{_lambda_.7} parent=27 // pred_fallthru
        _
    $region28: #{_lambda_.7} parent=5 // pred_fallthru
      _
    %p411 = scmp.le.s32.totalorder 2, %s10
    // Predicated region
    $region37: #{_lambda_.7} parent=5 // pred_check
      %p412 = pneg %p411
    $region38: #{_lambda_.7} parent=5 // pred_check_branch
      %414 = sbr.rel (%p412) target = $region40
    $region39: #{_lambda_.7} parent=5 // pred_region
      %s415 = ssub.s32 %s10, 2
      // Predicated region
      $region41: #{_lambda_.7} parent=39 // pred_check
        %p416 = pneg %p86
      $region42: #{_lambda_.7} parent=39 // pred_check_branch
        %418 = sbr.rel (%p416) target = $region44
      $region43: #{_lambda_.7} parent=39 // pred_region
        %s419 = smul.u32 8, %s16
        %p420 = scmp.lt.s32.totalorder %s419, 15
        %s421 = scalar_select %p420, %s419, 15
        %s422 = smul.addr %s421, 4
        %s423 = scalar_lea.vmem %s2, %s422
      $region44: #{_lambda_.7} parent=39 // pred_fallthru
        _
      // Predicated region
      $region45: #{_lambda_.7} parent=39 // pred_check
        %p424 = pneg %p112
      $region46: #{_lambda_.7} parent=39 // pred_check_branch
        %426 = sbr.rel (%p424) target = $region48
      $region47: #{_lambda_.7} parent=39 // pred_region
        %p427 = scmp.lt.s32.totalorder %s16, 1
        %s428 = scalar_select %p427, %s16, 1
        %s429 = smul.addr %s428, 2
        %s430 = scalar_lea.vmem %s3, %s429
      $region48: #{_lambda_.7} parent=39 // pred_fallthru
        _
    $region40: #{_lambda_.7} parent=5 // pred_fallthru
      _
  $region6: #{_lambda_.7} parent=0 // loop_footer
    %s14 = sadd.s32 1, %s10
  $region7: #{_lambda_.7} parent=0 // loop_footer_branch
    %9 = sbr.rel target = $region3
  $region8: #{_lambda_.7} parent=0 // loop_exit
    _

// kernel: _lambda_.10
$region0: #{_lambda_.10}
  #allocation0 [shape = 'u32[]', space=smem, size = 0x4, offset = 0x4, fixed_abs, tag = 'smem constant byte address 0x4 - core index']
  #allocation1 [shape = 'u32[144,128]{1,0:T(1,128)}', space=vmem, size = 0x12000, scoped, tag = 'internal scratch']
  %s0 = inlined_call_operand.vmem [shape: bf16[32,16], index: 0, kind: input, shape index: {}]
  %s1 = inlined_call_operand.vmem [shape: f32[1,16], index: 1, kind: input, shape index: {}]
  %s2 = inlined_call_operand.vmem [shape: f32[1,16], index: 2, kind: input, shape index: {}]
  %s3 = inlined_call_operand.vmem [shape: bf16[32,16], index: 3, kind: output, shape index: {}]
  %s4 = sld [smem:[#allocation0]]
  $region45: #{_lambda_.10} parent=0
    _
  %s6 = ssub.s32 1, %s4
  %s7 = scalar_select 0, %s6, %s4
  loop: start=0, step=1, limit=4
  $region2: #{_lambda_.10} parent=0 // loop_pre_header
    _
  $region3: #{_lambda_.10} parent=0 // loop_header
    %s9 = sphi 0, %s13
    %p10 = scmp.ge.s32.totalorder %s9, 4
    %s19 = sphi 0, %s21
    %s22 = sphi 0, %s19
    %s23 = sphi 0, %s22
    %s39 = sphi 0, %s23
    %s43 = sphi 0, %s43
    %s45 = sphi 0, %s43
    %s46 = sphi 0, %s45
    %s60 = sphi 0, %s46
    %s64 = sphi 0, %s64
    %s66 = sphi 0, %s64
    %s67 = sphi 0, %s66
    %s81 = sphi 0, %s67
    %s87 = sphi 0, %s89
    %s90 = sphi 0, %s87
    %s91 = sphi 0, %s90
    %s107 = sphi 0, %s91
  $region4: #{_lambda_.10} parent=0 // loop_header_branch
    %12 = sbr.rel (%p10) target = $region8
  $region5: #{_lambda_.10} parent=0 // loop_body
    %s14 = ssub.s32 %s9, 1
    %s15 = ssub.s32 %s9, 2
    %s16 = sadd.s32 %s9, 1
    %s17 = ssub.s32 %s9, %s16
    %p18 = scmp.eq.s32.totalorder %s17, 0
    %s20 = sadd.s32 %s19, 1
    %s21 = scalar_select %p18, %s19, %s20
    %p24 = pneg %p18
    %p25 = scmp.eq.s32.totalorder %s9, 1
    %p26 = por %p24, %p25
    %p27 = scmp.ne.s32.totalorder %s19, %s22
    %p28 = scmp.eq.s32.totalorder %s9, 0
    %p29 = por %p27, %p28
    %p30 = scmp.ne.s32.totalorder %s19, %s22
    %p31 = scmp.eq.s32.totalorder %s14, 1
    %p32 = por %p30, %p31
    %p33 = scmp.ne.s32.totalorder %s22, %s23
    %p34 = scmp.eq.s32.totalorder %s14, 0
    %p35 = por %p33, %p34
    %p36 = scmp.ne.s32.totalorder %s22, %s23
    %p37 = scmp.eq.s32.totalorder %s15, 1
    %p38 = por %p36, %p37
    %p40 = scmp.ne.s32.totalorder %s23, %s39
    %p41 = scmp.eq.s32.totalorder %s15, 0
    %p42 = por %p40, %p41
    %s44 = sadd.s32 %s43, 1
    %p47 = scmp.eq.s32.totalorder %s9, 1
    %p48 = scmp.ne.s32.totalorder %s43, %s45
    %p49 = scmp.eq.s32.totalorder %s9, 0
    %p50 = por %p48, %p49
    %p51 = scmp.ne.s32.totalorder %s43, %s45
    %p52 = scmp.eq.s32.totalorder %s14, 1
    %p53 = por %p51, %p52
    %p54 = scmp.ne.s32.totalorder %s45, %s46
    %p55 = scmp.eq.s32.totalorder %s14, 0
    %p56 = por %p54, %p55
    %p57 = scmp.ne.s32.totalorder %s45, %s46
    %p58 = scmp.eq.s32.totalorder %s15, 1
    %p59 = por %p57, %p58
    %p61 = scmp.ne.s32.totalorder %s46, %s60
    %p62 = scmp.eq.s32.totalorder %s15, 0
    %p63 = por %p61, %p62
    %s65 = sadd.s32 %s64, 1
    %p68 = scmp.eq.s32.totalorder %s9, 1
    %p69 = scmp.ne.s32.totalorder %s64, %s66
    %p70 = scmp.eq.s32.totalorder %s9, 0
    %p71 = por %p69, %p70
    %p72 = scmp.ne.s32.totalorder %s64, %s66
    %p73 = scmp.eq.s32.totalorder %s14, 1
    %p74 = por %p72, %p73
    %p75 = scmp.ne.s32.totalorder %s66, %s67
    %p76 = scmp.eq.s32.totalorder %s14, 0
    %p77 = por %p75, %p76
    %p78 = scmp.ne.s32.totalorder %s66, %s67
    %p79 = scmp.eq.s32.totalorder %s15, 1
    %p80 = por %p78, %p79
    %p82 = scmp.ne.s32.totalorder %s67, %s81
    %p83 = scmp.eq.s32.totalorder %s15, 0
    %p84 = por %p82, %p83
    %s85 = ssub.s32 %s9, %s16
    %p86 = scmp.eq.s32.totalorder %s85, 0
    %s88 = sadd.s32 %s87, 1
    %s89 = scalar_select %p86, %s87, %s88
    %p92 = pneg %p86
    %p93 = scmp.eq.s32.totalorder %s9, 1
    %p94 = por %p92, %p93
    %p95 = scmp.ne.s32.totalorder %s87, %s90
    %p96 = scmp.eq.s32.totalorder %s9, 0
    %p97 = por %p95, %p96
    %p98 = scmp.ne.s32.totalorder %s87, %s90
    %p99 = scmp.eq.s32.totalorder %s14, 1
    %p100 = por %p98, %p99
    %p101 = scmp.ne.s32.totalorder %s90, %s91
    %p102 = scmp.eq.s32.totalorder %s14, 0
    %p103 = por %p101, %p102
    %p104 = scmp.ne.s32.totalorder %s90, %s91
    %p105 = scmp.eq.s32.totalorder %s15, 1
    %p106 = por %p104, %p105
    %p108 = scmp.ne.s32.totalorder %s91, %s107
    %p109 = scmp.eq.s32.totalorder %s15, 0
    %p110 = por %p108, %p109
    %p111 = scmp.le.s32.totalorder 1, %s9
    %p112 = scmp.lt.s32.totalorder %s9, 3
    %p113 = pnand %p111, %p112
    %p114 = pneg %p113
    // Predicated region
    $region9: #{_lambda_.10} parent=5 // pred_check
      _
    $region10: #{_lambda_.10} parent=5 // pred_check_branch
      %116 = sbr.rel (%p113) target = $region12
    $region11: #{_lambda_.10} parent=5 // pred_region
      %s117 = ssub.s32 %s9, 1
      // Predicated region
      $region13: #{_lambda_.10} parent=11 // pred_check
        %p118 = pneg %p56
      $region14: #{_lambda_.10} parent=11 // pred_check_branch
        %120 = sbr.rel (%p118) target = $region16
      $region15: #{_lambda_.10} parent=11 // pred_region
        _
      $region16: #{_lambda_.10} parent=11 // pred_fallthru
        _
      // Predicated region
      $region17: #{_lambda_.10} parent=11 // pred_check
        %p121 = pneg %p77
      $region18: #{_lambda_.10} parent=11 // pred_check_branch
        %123 = sbr.rel (%p121) target = $region20
      $region19: #{_lambda_.10} parent=11 // pred_region
        _
      $region20: #{_lambda_.10} parent=11 // pred_fallthru
        _
    $region12: #{_lambda_.10} parent=5 // pred_fallthru
      _
    %p124 = scmp.lt.s32.totalorder %s9, 2
    // Predicated region
    $region21: #{_lambda_.10} parent=5 // pred_check
      %p125 = pneg %p124
    $region22: #{_lambda_.10} parent=5 // pred_check_branch
      %127 = sbr.rel (%p125) target = $region24
    $region23: #{_lambda_.10} parent=5 // pred_region
      // Predicated region
      $region25: #{_lambda_.10} parent=23 // pred_check
        %p128 = pneg %p29
      $region26: #{_lambda_.10} parent=23 // pred_check_branch
        %130 = sbr.rel (%p128) target = $region28
      $region27: #{_lambda_.10} parent=23 // pred_region
        %s131 = smul.u32 2, %s9
        %p132 = scmp.lt.s32.totalorder %s131, 3
        %s133 = scalar_select %p132, %s131, 3
        %s134 = smul.addr %s133, 4
        %s135 = scalar_lea.vmem %s0, %s134
        %s136 = smul.u32 2, %s9
      $region28: #{_lambda_.10} parent=23 // pred_fallthru
        _
    $region24: #{_lambda_.10} parent=5 // pred_fallthru
      _
    %p137 = scmp.le.s32.totalorder 1, %s9
    %p138 = scmp.lt.s32.totalorder %s9, 3
    %p139 = pnand %p137, %p138
    %p140 = pneg %p139
    // Predicated region
    $region29: #{_lambda_.10} parent=5 // pred_check
      _
    $region30: #{_lambda_.10} parent=5 // pred_check_branch
      %142 = sbr.rel (%p139) target = $region32
    $region31: #{_lambda_.10} parent=5 // pred_region
      %s143 = ssub.s32 %s9, 1
      %s144 = smul.u32 2, %s14
      %p145 = scmp.lt.s32.totalorder %s144, 3
      %s146 = scalar_select %p145, %s144, 3
      %s147 = smul.addr %s146, 4
      %s148 = scalar_lea.vmem %s0, %s147
      %p149 = pneg %p35
      %p150 = pneg %p32
      %p151 = pneg %p56
      %p152 = pneg %p53
      %p153 = pneg %p77
      %p154 = pneg %p74
      %p155 = pneg %p103
      %p156 = pneg %p100
      %s157 = smul.u32 2, %s14
      %p158 = scmp.lt.s32.totalorder %s157, 3
      %s159 = scalar_select %p158, %s157, 3
      %s160 = smul.addr %s159, 4
      %s161 = scalar_lea.vmem %s3, %s160
      %s162 = smul.u32 2, %s14
      %p163 = scmp.lt.s32.totalorder %s162, 3
      %s164 = scalar_select %p163, %s162, 3
      %s165 = smul.addr %s164, 4
      %s166 = scalar_lea.vmem %s0, %s165
      %s167 = smul.u32 2, %s14
      %s168 = smul.u32 2, %s14
      %p169 = scmp.lt.s32.totalorder %s168, 3
      %s170 = scalar_select %p169, %s168, 3
      %s171 = smul.addr %s170, 4
      %s172 = scalar_lea.vmem %s3, %s171
      %s173 = smul.u32 2, %s14
      %v174 = vld [vmem:[%s166] sm:$0xf]
      %v175 = vld [vmem:[%s166 + $0x4] sm:$0xf]
      %v176 = vunpack.c.l.bf16 %v174
      %v177 = vunpack.c.l.bf16 %v175
      %v178 = vld [vmem:[%s1] sm:$0x1]
      %v180 = vlaneseq
      %v181 = vshrl.u32 %v180, 7
      %v182 = vsub.s32 0, %v181
      %v183 = vrot.slane %v178, %v182
      %v185 = vmul.f32 %v176, %v183
      %v186 = vmul.f32 %v177, %v183
      %v187 = vld [vmem:[%s2] sm:$0x1]
      %v189 = vlaneseq
      %v190 = vshrl.u32 %v189, 7
      %v191 = vsub.s32 0, %v190
      %v192 = vrot.slane %v187, %v191
      %v194 = vadd.f32 %v185, %v192
      %v195 = vadd.f32 %v186, %v192
      %vm196 = vcmp.ge.f32.partialorder %v194, 0.0
      %vm197 = vcmp.ge.f32.partialorder %v195, 0.0
      %v198 = vmul.f32 %v194, 0.2
      %v199 = vmul.f32 %v195, 0.2
      %v200 = vsel %vm196, %v194, %v198
      %v201 = vsel %vm197, %v195, %v199
      %v202 = vpack.c.bf16 %v201, %v200
      %v204 = vunpack.c.l.b16 %v202
      %v205 = vunpack.c.h.b16 %v202
      %v206 = vpack.c.b16 %v204, %v204
      %v207 = vpack.c.b16 %v205, %v205
      %vm210 = vcmask 125952
      %211 = vst.msk [vmem:[%s172] sm:$0xf] %vm210, %v206
      %212 = vst.msk [vmem:[%s172 + $0x4] sm:$0xf] %vm210, %v207
      %s213 = smul.u32 2, %s14
      %p214 = scmp.lt.s32.totalorder %s213, 3
      %s215 = scalar_select %p214, %s213, 3
      %s216 = smul.addr %s215, 4
      %s217 = scalar_lea.vmem %s3, %s216
      // Predicated region
      $region33: #{_lambda_.10} parent=31 // pred_check
        %p218 = pneg %p100
      $region34: #{_lambda_.10} parent=31 // pred_check_branch
        %220 = sbr.rel (%p218) target = $region36
      $region35: #{_lambda_.10} parent=31 // pred_region
        %s221 = smul.u32 2, %s14
      $region36: #{_lambda_.10} parent=31 // pred_fallthru
        _
    $region32: #{_lambda_.10} parent=5 // pred_fallthru
      _
    %p222 = scmp.le.s32.totalorder 2, %s9
    // Predicated region
    $region37: #{_lambda_.10} parent=5 // pred_check
      %p223 = pneg %p222
    $region38: #{_lambda_.10} parent=5 // pred_check_branch
      %225 = sbr.rel (%p223) target = $region40
    $region39: #{_lambda_.10} parent=5 // pred_region
      %s226 = ssub.s32 %s9, 2
      // Predicated region
      $region41: #{_lambda_.10} parent=39 // pred_check
        %p227 = pneg %p106
      $region42: #{_lambda_.10} parent=39 // pred_check_branch
        %229 = sbr.rel (%p227) target = $region44
      $region43: #{_lambda_.10} parent=39 // pred_region
        %s230 = smul.u32 2, %s15
        %p231 = scmp.lt.s32.totalorder %s230, 3
        %s232 = scalar_select %p231, %s230, 3
        %s233 = smul.addr %s232, 4
        %s234 = scalar_lea.vmem %s3, %s233
      $region44: #{_lambda_.10} parent=39 // pred_fallthru
        _
    $region40: #{_lambda_.10} parent=5 // pred_fallthru
      _
  $region6: #{_lambda_.10} parent=0 // loop_footer
    %s13 = sadd.s32 1, %s9
  $region7: #{_lambda_.10} parent=0 // loop_footer_branch
    %8 = sbr.rel target = $region3
  $region8: #{_lambda_.10} parent=0 // loop_exit
    _

// kernel: _lambda_.9
$region0: #{_lambda_.9}
  #allocation0 [shape = 'u32[]', space=smem, size = 0x4, offset = 0x4, fixed_abs, tag = 'smem constant byte address 0x4 - core index']
  #allocation1 [shape = 'u32[144,128]{1,0:T(1,128)}', space=vmem, size = 0x12000, scoped, tag = 'internal scratch']
  %s0 = inlined_call_operand.vmem [shape: bf16[32,128], index: 0, kind: input, shape index: {}]
  %s1 = inlined_call_operand.vmem [shape: bf16[128,128], index: 1, kind: input, shape index: {}]
  %s2 = inlined_call_operand.vmem [shape: bf16[32,16], index: 2, kind: output, shape index: {0}]
  %s3 = inlined_call_operand.vmem [shape: f32[2,2,16], index: 3, kind: output, shape index: {1}]
  %4 = xla_tuple %s2, %s3
  %s5 = sld [smem:[#allocation0]]
  $region49: #{_lambda_.9} parent=0
    _
  %s7 = ssub.s32 1, %s5
  %s8 = scalar_select 0, %s7, %s5
  loop: start=0, step=1, limit=4
  $region2: #{_lambda_.9} parent=0 // loop_pre_header
    _
  $region3: #{_lambda_.9} parent=0 // loop_header
    %s10 = sphi 0, %s14
    %p11 = scmp.ge.s32.totalorder %s10, 4
    %s20 = sphi 0, %s22
    %s23 = sphi 0, %s20
    %s24 = sphi 0, %s23
    %s40 = sphi 0, %s24
    %s44 = sphi 0, %s44
    %s46 = sphi 0, %s44
    %s47 = sphi 0, %s46
    %s61 = sphi 0, %s47
    %s67 = sphi 0, %s69
    %s70 = sphi 0, %s67
    %s71 = sphi 0, %s70
    %s87 = sphi 0, %s71
    %s93 = sphi 0, %s95
    %s96 = sphi 0, %s93
    %s97 = sphi 0, %s96
    %s113 = sphi 0, %s97
  $region4: #{_lambda_.9} parent=0 // loop_header_branch
    %13 = sbr.rel (%p11) target = $region8
  $region5: #{_lambda_.9} parent=0 // loop_body
    %s15 = ssub.s32 %s10, 1
    %s16 = ssub.s32 %s10, 2
    %s17 = sadd.s32 %s10, 1
    %s18 = ssub.s32 %s10, %s17
    %p19 = scmp.eq.s32.totalorder %s18, 0
    %s21 = sadd.s32 %s20, 1
    %s22 = scalar_select %p19, %s20, %s21
    %p25 = pneg %p19
    %p26 = scmp.eq.s32.totalorder %s10, 1
    %p27 = por %p25, %p26
    %p28 = scmp.ne.s32.totalorder %s20, %s23
    %p29 = scmp.eq.s32.totalorder %s10, 0
    %p30 = por %p28, %p29
    %p31 = scmp.ne.s32.totalorder %s20, %s23
    %p32 = scmp.eq.s32.totalorder %s15, 1
    %p33 = por %p31, %p32
    %p34 = scmp.ne.s32.totalorder %s23, %s24
    %p35 = scmp.eq.s32.totalorder %s15, 0
    %p36 = por %p34, %p35
    %p37 = scmp.ne.s32.totalorder %s23, %s24
    %p38 = scmp.eq.s32.totalorder %s16, 1
    %p39 = por %p37, %p38
    %p41 = scmp.ne.s32.totalorder %s24, %s40
    %p42 = scmp.eq.s32.totalorder %s16, 0
    %p43 = por %p41, %p42
    %s45 = sadd.s32 %s44, 1
    %p48 = scmp.eq.s32.totalorder %s10, 1
    %p49 = scmp.ne.s32.totalorder %s44, %s46
    %p50 = scmp.eq.s32.totalorder %s10, 0
    %p51 = por %p49, %p50
    %p52 = scmp.ne.s32.totalorder %s44, %s46
    %p53 = scmp.eq.s32.totalorder %s15, 1
    %p54 = por %p52, %p53
    %p55 = scmp.ne.s32.totalorder %s46, %s47
    %p56 = scmp.eq.s32.totalorder %s15, 0
    %p57 = por %p55, %p56
    %p58 = scmp.ne.s32.totalorder %s46, %s47
    %p59 = scmp.eq.s32.totalorder %s16, 1
    %p60 = por %p58, %p59
    %p62 = scmp.ne.s32.totalorder %s47, %s61
    %p63 = scmp.eq.s32.totalorder %s16, 0
    %p64 = por %p62, %p63
    %s65 = ssub.s32 %s10, %s17
    %p66 = scmp.eq.s32.totalorder %s65, 0
    %s68 = sadd.s32 %s67, 1
    %s69 = scalar_select %p66, %s67, %s68
    %p72 = pneg %p66
    %p73 = scmp.eq.s32.totalorder %s10, 1
    %p74 = por %p72, %p73
    %p75 = scmp.ne.s32.totalorder %s67, %s70
    %p76 = scmp.eq.s32.totalorder %s10, 0
    %p77 = por %p75, %p76
    %p78 = scmp.ne.s32.totalorder %s67, %s70
    %p79 = scmp.eq.s32.totalorder %s15, 1
    %p80 = por %p78, %p79
    %p81 = scmp.ne.s32.totalorder %s70, %s71
    %p82 = scmp.eq.s32.totalorder %s15, 0
    %p83 = por %p81, %p82
    %p84 = scmp.ne.s32.totalorder %s70, %s71
    %p85 = scmp.eq.s32.totalorder %s16, 1
    %p86 = por %p84, %p85
    %p88 = scmp.ne.s32.totalorder %s71, %s87
    %p89 = scmp.eq.s32.totalorder %s16, 0
    %p90 = por %p88, %p89
    %s91 = ssub.s32 %s10, %s17
    %p92 = scmp.eq.s32.totalorder %s91, 0
    %s94 = sadd.s32 %s93, 1
    %s95 = scalar_select %p92, %s93, %s94
    %p98 = pneg %p92
    %p99 = scmp.eq.s32.totalorder %s10, 1
    %p100 = por %p98, %p99
    %p101 = scmp.ne.s32.totalorder %s93, %s96
    %p102 = scmp.eq.s32.totalorder %s10, 0
    %p103 = por %p101, %p102
    %p104 = scmp.ne.s32.totalorder %s93, %s96
    %p105 = scmp.eq.s32.totalorder %s15, 1
    %p106 = por %p104, %p105
    %p107 = scmp.ne.s32.totalorder %s96, %s97
    %p108 = scmp.eq.s32.totalorder %s15, 0
    %p109 = por %p107, %p108
    %p110 = scmp.ne.s32.totalorder %s96, %s97
    %p111 = scmp.eq.s32.totalorder %s16, 1
    %p112 = por %p110, %p111
    %p114 = scmp.ne.s32.totalorder %s97, %s113
    %p115 = scmp.eq.s32.totalorder %s16, 0
    %p116 = por %p114, %p115
    %p117 = scmp.le.s32.totalorder 1, %s10
    %p118 = scmp.lt.s32.totalorder %s10, 3
    %p119 = pnand %p117, %p118
    %p120 = pneg %p119
    // Predicated region
    $region9: #{_lambda_.9} parent=5 // pred_check
      _
    $region10: #{_lambda_.9} parent=5 // pred_check_branch
      %122 = sbr.rel (%p119) target = $region12
    $region11: #{_lambda_.9} parent=5 // pred_region
      %s123 = ssub.s32 %s10, 1
      // Predicated region
      $region13: #{_lambda_.9} parent=11 // pred_check
        %p124 = pneg %p57
      $region14: #{_lambda_.9} parent=11 // pred_check_branch
        %126 = sbr.rel (%p124) target = $region16
      $region15: #{_lambda_.9} parent=11 // pred_region
        _
      $region16: #{_lambda_.9} parent=11 // pred_fallthru
        _
    $region12: #{_lambda_.9} parent=5 // pred_fallthru
      _
    %p127 = scmp.lt.s32.totalorder %s10, 2
    // Predicated region
    $region17: #{_lambda_.9} parent=5 // pred_check
      %p128 = pneg %p127
    $region18: #{_lambda_.9} parent=5 // pred_check_branch
      %130 = sbr.rel (%p128) target = $region20
    $region19: #{_lambda_.9} parent=5 // pred_region
      // Predicated region
      $region21: #{_lambda_.9} parent=19 // pred_check
        %p131 = pneg %p30
      $region22: #{_lambda_.9} parent=19 // pred_check_branch
        %133 = sbr.rel (%p131) target = $region24
      $region23: #{_lambda_.9} parent=19 // pred_region
        %s134 = smul.u32 2, %s10
        %p135 = scmp.lt.s32.totalorder %s134, 3
        %s136 = scalar_select %p135, %s134, 3
        %s137 = smul.addr %s136, 4
        %s138 = scalar_lea.vmem %s0, %s137
        %s139 = smul.u32 2, %s10
      $region24: #{_lambda_.9} parent=19 // pred_fallthru
        _
    $region20: #{_lambda_.9} parent=5 // pred_fallthru
      _
    %p140 = scmp.le.s32.totalorder 1, %s10
    %p141 = scmp.lt.s32.totalorder %s10, 3
    %p142 = pnand %p140, %p141
    %p143 = pneg %p142
    // Predicated region
    $region25: #{_lambda_.9} parent=5 // pred_check
      _
    $region26: #{_lambda_.9} parent=5 // pred_check_branch
      %145 = sbr.rel (%p142) target = $region28
    $region27: #{_lambda_.9} parent=5 // pred_region
      %s146 = ssub.s32 %s10, 1
      %s147 = smul.u32 2, %s15
      %p148 = scmp.lt.s32.totalorder %s147, 3
      %s149 = scalar_select %p148, %s147, 3
      %s150 = smul.addr %s149, 4
      %s151 = scalar_lea.vmem %s0, %s150
      %p152 = pneg %p36
      %p153 = pneg %p33
      %p154 = pneg %p57
      %p155 = pneg %p54
      %p156 = pneg %p83
      %p157 = pneg %p80
      %s158 = smul.u32 2, %s15
      %p159 = scmp.lt.s32.totalorder %s158, 3
      %s160 = scalar_select %p159, %s158, 3
      %s161 = smul.addr %s160, 4
      %s162 = scalar_lea.vmem %s2, %s161
      %p163 = pneg %p109
      %p164 = pneg %p106
      %p165 = scmp.lt.s32.totalorder %s15, 1
      %s166 = scalar_select %p165, %s15, 1
      %s167 = smul.addr %s166, 2
      %s168 = scalar_lea.vmem %s3, %s167
      %s169 = smul.u32 2, %s15
      %p170 = scmp.lt.s32.totalorder %s169, 3
      %s171 = scalar_select %p170, %s169, 3
      %s172 = smul.addr %s171, 4
      %s173 = scalar_lea.vmem %s0, %s172
      %s174 = smul.u32 2, %s15
      %s175 = smul.u32 2, %s15
      %p176 = scmp.lt.s32.totalorder %s175, 3
      %s177 = scalar_select %p176, %s175, 3
      %s178 = smul.addr %s177, 4
      %s179 = scalar_lea.vmem %s2, %s178
      %s180 = smul.u32 2, %s15
      %p181 = scmp.lt.s32.totalorder %s15, 1
      %s182 = scalar_select %p181, %s15, 1
      %s183 = smul.addr %s182, 2
      %s184 = scalar_lea.vmem %s3, %s183
      %v186 = vld [vmem:[%s173] sm:$0xf]
      %v187 = vld [vmem:[%s173 + $0x4] sm:$0xf]
      %v188 = vld [vmem:[%s1] sm:$0xf]
      %v189 = vld [vmem:[%s1 + $0x4] sm:$0xf]
      %v190 = vld [vmem:[%s1 + $0x8] sm:$0xf]
      %v191 = vld [vmem:[%s1 + $0xc] sm:$0xf]
      %v192 = vld [vmem:[%s1 + $0x10] sm:$0xf]
      %v193 = vld [vmem:[%s1 + $0x14] sm:$0xf]
      %v194 = vld [vmem:[%s1 + $0x18] sm:$0xf]
      %v195 = vld [vmem:[%s1 + $0x1c] sm:$0xf]
      %v196 = vld [vmem:[%s1 + $0x20] sm:$0xf]
      %v197 = vld [vmem:[%s1 + $0x24] sm:$0xf]
      %v198 = vld [vmem:[%s1 + $0x28] sm:$0xf]
      %v199 = vld [vmem:[%s1 + $0x2c] sm:$0xf]
      %v200 = vld [vmem:[%s1 + $0x30] sm:$0xf]
      %v201 = vld [vmem:[%s1 + $0x34] sm:$0xf]
      %v202 = vld [vmem:[%s1 + $0x38] sm:$0xf]
      %v203 = vld [vmem:[%s1 + $0x3c] sm:$0xf]
      %v206 = vunpack.c.l.b16 %v186
      %v207 = vunpack.c.l.b16 %v187
      %v208 = vpack.c.b16 %v207, %v206
      %v226 = vunpack.c.l.b16 %v188
      %v227 = vunpack.c.l.b16 %v189
      %v228 = vunpack.c.l.b16 %v190
      %v229 = vunpack.c.l.b16 %v191
      %v230 = vunpack.c.l.b16 %v192
      %v231 = vunpack.c.l.b16 %v193
      %v232 = vunpack.c.l.b16 %v194
      %v233 = vunpack.c.l.b16 %v195
      %v234 = vunpack.c.l.b16 %v196
      %v235 = vunpack.c.l.b16 %v197
      %v236 = vunpack.c.l.b16 %v198
      %v237 = vunpack.c.l.b16 %v199
      %v238 = vunpack.c.l.b16 %v200
      %v239 = vunpack.c.l.b16 %v201
      %v240 = vunpack.c.l.b16 %v202
      %v241 = vunpack.c.l.b16 %v203
      %v242 = vpack.c.b16 %v227, %v226
      %v243 = vpack.c.b16 %v229, %v228
      %v244 = vpack.c.b16 %v231, %v230
      %v245 = vpack.c.b16 %v233, %v232
      %v246 = vpack.c.b16 %v235, %v234
      %v247 = vpack.c.b16 %v237, %v236
      %v248 = vpack.c.b16 %v239, %v238
      %v249 = vpack.c.b16 %v241, %v240
      %258 = vmatprep.subr.bf16.mxu0 0
      %259 = vmatpush1.bf16.msra.mxu0 %v249
      %260 = vmatprep.subr.bf16.mxu0 0
      %261 = vmatpush1.bf16.msra.mxu0 %v248
      %262 = vmatprep.subr.bf16.mxu0 0
      %263 = vmatpush1.bf16.msra.mxu0 %v247
      %264 = vmatprep.subr.bf16.mxu0 0
      %265 = vmatpush1.bf16.msra.mxu0 %v246
      %266 = vmatprep.subr.bf16.mxu0 0
      %267 = vmatpush1.bf16.msra.mxu0 %v245
      %268 = vmatprep.subr.bf16.mxu0 0
      %269 = vmatpush1.bf16.msra.mxu0 %v244
      %270 = vmatprep.subr.bf16.mxu0 0
      %271 = vmatpush1.bf16.msra.mxu0 %v243
      %272 = vmatprep.subr.bf16.mxu0 0
      %273 = vmatpush1.bf16.msra.mxu0 %v242
      %274 = vmatprep.subr.bf16.mxu0 0
      %275 = vmatpush2.bf16.msra.mxu0 0
      %276 = vmatprep.subr.bf16.mxu0 0
      %277 = vmatpush2.bf16.msra.mxu0 0
      %278 = vmatprep.subr.bf16.mxu0 0
      %279 = vmatpush2.bf16.msra.mxu0 0
      %280 = vmatprep.subr.bf16.mxu0 0
      %281 = vmatpush2.bf16.msra.mxu0 0
      %282 = vmatprep.subr.bf16.mxu0 0
      %283 = vmatpush2.bf16.msra.mxu0 0
      %284 = vmatprep.subr.bf16.mxu0 0
      %285 = vmatpush2.bf16.msra.mxu0 0
      %286 = vmatprep.subr.bf16.mxu0 0
      %287 = vmatpush2.bf16.msra.mxu0 0
      %288 = vmatprep.subr.bf16.mxu0 0
      %289 = vmatpush2.bf16.msra.mxu0 0
      %290 = vmatprep.mubr.bf16.mxu0 0
      %291 = vmatmul.mubr.bf16.gmra.mxu0 %v208
      %v292 = vpop.f32.mrf.mxu0
      %v293 = vadd.f32 0.0, %v292
      %v294 = vpop.f32.mrf.mxu0
      %v295 = vpop.f32.mrf.mxu0
      %v296 = vadd.f32 0.0, %v295
      %v297 = vpop.f32.mrf.mxu0
      %298 = vdwg.mxu0
      %v299 = vmul.f32 %v293, %v293
      %v300 = vmul.f32 %v296, %v296
      %vm301 = vcmask 130048
      %v302 = vsel %vm301, %v293, 0.0
      %v303 = vsel %vm301, %v296, 0.0
      %v304 = vadd.f32 %v302, %v303
      %v305 = vrot.slane %v304, 4
      %v306 = vadd.f32 %v304, %v305
      %v307 = vrot.slane %v306, 2
      %v308 = vadd.f32 %v306, %v307
      %v309 = vrot.slane %v308, 1
      %v310 = vadd.f32 %v308, %v309
      %vm311 = vcmask 122880
      %312 = vst.msk [vmem:[%s184] sm:$0x1] %vm311, %v310
      %v313 = vsel %vm301, %v299, 0.0
      %v314 = vsel %vm301, %v300, 0.0
      %v315 = vadd.f32 %v313, %v314
      %v316 = vrot.slane %v315, 4
      %v317 = vadd.f32 %v315, %v316
      %v318 = vrot.slane %v317, 2
      %v319 = vadd.f32 %v317, %v318
      %v320 = vrot.slane %v319, 1
      %v321 = vadd.f32 %v319, %v320
      %322 = vst.msk [vmem:[%s184 + $0x1] sm:$0x1] %vm311, %v321
      %v323 = vpack.c.bf16 %v296, %v293
      %v325 = vunpack.c.l.b16 %v323
      %v326 = vunpack.c.h.b16 %v323
      %v327 = vpack.c.b16 %v325, %v325
      %v328 = vpack.c.b16 %v326, %v326
      %vm331 = vcmask 125952
      %332 = vst.msk [vmem:[%s179] sm:$0xf] %vm331, %v327
      %333 = vst.msk [vmem:[%s179 + $0x4] sm:$0xf] %vm331, %v328
      %s334 = smul.u32 2, %s15
      %p335 = scmp.lt.s32.totalorder %s334, 3
      %s336 = scalar_select %p335, %s334, 3
      %s337 = smul.addr %s336, 4
      %s338 = scalar_lea.vmem %s2, %s337
      %p339 = scmp.lt.s32.totalorder %s15, 1
      %s340 = scalar_select %p339, %s15, 1
      %s341 = smul.addr %s340, 2
      %s342 = scalar_lea.vmem %s3, %s341
      // Predicated region
      $region29: #{_lambda_.9} parent=27 // pred_check
        %p343 = pneg %p80
      $region30: #{_lambda_.9} parent=27 // pred_check_branch
        %345 = sbr.rel (%p343) target = $region32
      $region31: #{_lambda_.9} parent=27 // pred_region
        %s346 = smul.u32 2, %s15
      $region32: #{_lambda_.9} parent=27 // pred_fallthru
        _
      // Predicated region
      $region33: #{_lambda_.9} parent=27 // pred_check
        %p347 = pneg %p106
      $region34: #{_lambda_.9} parent=27 // pred_check_branch
        %349 = sbr.rel (%p347) target = $region36
      $region35: #{_lambda_.9} parent=27 // pred_region
        _
      $region36: #{_lambda_.9} parent=27 // pred_fallthru
        _
    $region28: #{_lambda_.9} parent=5 // pred_fallthru
      _
    %p350 = scmp.le.s32.totalorder 2, %s10
    // Predicated region
    $region37: #{_lambda_.9} parent=5 // pred_check
      %p351 = pneg %p350
    $region38: #{_lambda_.9} parent=5 // pred_check_branch
      %353 = sbr.rel (%p351) target = $region40
    $region39: #{_lambda_.9} parent=5 // pred_region
      %s354 = ssub.s32 %s10, 2
      // Predicated region
      $region41: #{_lambda_.9} parent=39 // pred_check
        %p355 = pneg %p86
      $region42: #{_lambda_.9} parent=39 // pred_check_branch
        %357 = sbr.rel (%p355) target = $region44
      $region43: #{_lambda_.9} parent=39 // pred_region
        %s358 = smul.u32 2, %s16
        %p359 = scmp.lt.s32.totalorder %s358, 3
        %s360 = scalar_select %p359, %s358, 3
        %s361 = smul.addr %s360, 4
        %s362 = scalar_lea.vmem %s2, %s361
      $region44: #{_lambda_.9} parent=39 // pred_fallthru
        _
      // Predicated region
      $region45: #{_lambda_.9} parent=39 // pred_check
        %p363 = pneg %p112
      $region46: #{_lambda_.9} parent=39 // pred_check_branch
        %365 = sbr.rel (%p363) target = $region48
      $region47: #{_lambda_.9} parent=39 // pred_region
        %p366 = scmp.lt.s32.totalorder %s16, 1
        %s367 = scalar_select %p366, %s16, 1
        %s368 = smul.addr %s367, 2
        %s369 = scalar_lea.vmem %s3, %s368
      $region48: #{_lambda_.9} parent=39 // pred_fallthru
        _
    $region40: #{_lambda_.9} parent=5 // pred_fallthru
      _
  $region6: #{_lambda_.9} parent=0 // loop_footer
    %s14 = sadd.s32 1, %s10
  $region7: #{_lambda_.9} parent=0 // loop_footer_branch
    %9 = sbr.rel target = $region3
  $region8: #{_lambda_.9} parent=0 // loop_exit
    _

// kernel: _lambda_.12
$region0: #{_lambda_.12}
  #allocation0 [shape = 'u32[]', space=smem, size = 0x4, offset = 0x4, fixed_abs, tag = 'smem constant byte address 0x4 - core index']
  #allocation1 [shape = 'u32[144,128]{1,0:T(1,128)}', space=vmem, size = 0x12000, scoped, tag = 'internal scratch']
  %s0 = inlined_call_operand.vmem [shape: bf16[8,32], index: 0, kind: input, shape index: {}]
  %s1 = inlined_call_operand.vmem [shape: f32[1,32], index: 1, kind: input, shape index: {}]
  %s2 = inlined_call_operand.vmem [shape: f32[1,32], index: 2, kind: input, shape index: {}]
  %s3 = inlined_call_operand.vmem [shape: bf16[8,32], index: 3, kind: output, shape index: {}]
  %s4 = sld [smem:[#allocation0]]
  $region22: #{_lambda_.12} parent=0
    _
  %s6 = ssub.s32 1, %s4
  %s7 = scalar_select 0, %s6, %s4
  // Predicated region
  $region2: #{_lambda_.12} parent=0 // pred_check
    _
  $region3: #{_lambda_.12} parent=0 // pred_check_branch
    %9 = sbr.rel (0) target = $region5
  $region4: #{_lambda_.12} parent=0 // pred_region
    _
  $region5: #{_lambda_.12} parent=0 // pred_fallthru
    _
  // Predicated region
  $region6: #{_lambda_.12} parent=0 // pred_check
    _
  $region7: #{_lambda_.12} parent=0 // pred_check_branch
    %11 = sbr.rel (0) target = $region9
  $region8: #{_lambda_.12} parent=0 // pred_region
    _
  $region9: #{_lambda_.12} parent=0 // pred_fallthru
    _
  // Predicated region
  $region10: #{_lambda_.12} parent=0 // pred_check
    _
  $region11: #{_lambda_.12} parent=0 // pred_check_branch
    %13 = sbr.rel (0) target = $region13
  $region12: #{_lambda_.12} parent=0 // pred_region
    _
  $region13: #{_lambda_.12} parent=0 // pred_fallthru
    _
  %v14 = vld [vmem:[%s0] sm:$0xf]
  %v15 = vunpack.c.l.bf16 %v14
  %v16 = vld [vmem:[%s1] sm:$0x1]
  %v18 = vlaneseq
  %v19 = vshrl.u32 %v18, 7
  %v20 = vsub.s32 0, %v19
  %v21 = vrot.slane %v16, %v20
  %v23 = vmul.f32 %v15, %v21
  %v24 = vld [vmem:[%s2] sm:$0x1]
  %v26 = vlaneseq
  %v27 = vshrl.u32 %v26, 7
  %v28 = vsub.s32 0, %v27
  %v29 = vrot.slane %v24, %v28
  %v31 = vadd.f32 %v23, %v29
  %vm32 = vcmp.ge.f32.partialorder %v31, 0.0
  %v33 = vmul.f32 %v31, 0.2
  %v34 = vsel %vm32, %v31, %v33
  %v35 = vpack.c.bf16 %v34, %v34
  %vm36 = vcmask 257024
  %37 = vst.msk [vmem:[%s3] sm:$0xf] %vm36, %v35
  // Predicated region
  $region14: #{_lambda_.12} parent=0 // pred_check
    _
  $region15: #{_lambda_.12} parent=0 // pred_check_branch
    %39 = sbr.rel (0) target = $region17
  $region16: #{_lambda_.12} parent=0 // pred_region
    _
  $region17: #{_lambda_.12} parent=0 // pred_fallthru
    _
  // Predicated region
  $region18: #{_lambda_.12} parent=0 // pred_check
    _
  $region19: #{_lambda_.12} parent=0 // pred_check_branch
    %41 = sbr.rel (0) target = $region21
  $region20: #{_lambda_.12} parent=0 // pred_region
    _
  $region21: #{_lambda_.12} parent=0 // pred_fallthru
    _

// kernel: _lambda_.13
$region0: #{_lambda_.13}
  #allocation0 [shape = 'u32[]', space=smem, size = 0x4, offset = 0x4, fixed_abs, tag = 'smem constant byte address 0x4 - core index']
  #allocation1 [shape = 'u32[144,128]{1,0:T(1,128)}', space=vmem, size = 0x12000, scoped, tag = 'internal scratch']
  #allocation2 [shape = 'f32[2,128]{1,0:T(2,128)}', space=vmem, size = 0x400, scoped, tag = 'scratch operand']
  %s0 = inlined_call_operand.vmem [shape: bf16[2,128], index: 0, kind: input, shape index: {}]
  %s1 = inlined_call_operand.vmem [shape: bf16[128,128], index: 1, kind: input, shape index: {}]
  %s2 = inlined_call_operand.vmem [shape: f32[1,128], index: 2, kind: input, shape index: {}]
  %s3 = inlined_call_operand.vmem [shape: f32[2,128], index: 3, kind: output, shape index: {}]
  %s4 = sld [smem:[#allocation0]]
  $region30: #{_lambda_.13} parent=0
    _
  %s6 = ssub.s32 1, %s4
  %s7 = scalar_select 0, %s6, %s4
  // Predicated region
  $region2: #{_lambda_.13} parent=0 // pred_check
    _
  $region3: #{_lambda_.13} parent=0 // pred_check_branch
    %9 = sbr.rel (0) target = $region5
  $region4: #{_lambda_.13} parent=0 // pred_region
    _
  $region5: #{_lambda_.13} parent=0 // pred_fallthru
    _
  // Predicated region
  $region6: #{_lambda_.13} parent=0 // pred_check
    _
  $region7: #{_lambda_.13} parent=0 // pred_check_branch
    %11 = sbr.rel (0) target = $region9
  $region8: #{_lambda_.13} parent=0 // pred_region
    _
  $region9: #{_lambda_.13} parent=0 // pred_fallthru
    _
  // Predicated region
  $region10: #{_lambda_.13} parent=0 // pred_check
    _
  $region11: #{_lambda_.13} parent=0 // pred_check_branch
    %13 = sbr.rel (0) target = $region13
  $region12: #{_lambda_.13} parent=0 // pred_region
    _
  $region13: #{_lambda_.13} parent=0 // pred_fallthru
    _
  %p15 = scmp.eq.s32.totalorder 0, 0
  // Predicated region
  $region14: #{_lambda_.13} parent=0 // pred_check
    %p16 = pneg %p15
  $region15: #{_lambda_.13} parent=0 // pred_check_branch
    %18 = sbr.rel (%p16) target = $region17
  $region16: #{_lambda_.13} parent=0 // pred_region
    %19 = vst [vmem:[#allocation2] sm:$0x3] 0.0
  $region17: #{_lambda_.13} parent=0 // pred_fallthru
    _
  %v20 = vld [vmem:[#allocation2] sm:$0x3]
  %v21 = vld [vmem:[%s0] sm:$0x1]
  %v22 = vld [vmem:[%s1] sm:$0xf]
  %v23 = vld [vmem:[%s1 + $0x4] sm:$0xf]
  %v24 = vld [vmem:[%s1 + $0x8] sm:$0xf]
  %v25 = vld [vmem:[%s1 + $0xc] sm:$0xf]
  %v26 = vld [vmem:[%s1 + $0x10] sm:$0xf]
  %v27 = vld [vmem:[%s1 + $0x14] sm:$0xf]
  %v28 = vld [vmem:[%s1 + $0x18] sm:$0xf]
  %v29 = vld [vmem:[%s1 + $0x1c] sm:$0xf]
  %v30 = vld [vmem:[%s1 + $0x20] sm:$0xf]
  %v31 = vld [vmem:[%s1 + $0x24] sm:$0xf]
  %v32 = vld [vmem:[%s1 + $0x28] sm:$0xf]
  %v33 = vld [vmem:[%s1 + $0x2c] sm:$0xf]
  %v34 = vld [vmem:[%s1 + $0x30] sm:$0xf]
  %v35 = vld [vmem:[%s1 + $0x34] sm:$0xf]
  %v36 = vld [vmem:[%s1 + $0x38] sm:$0xf]
  %v37 = vld [vmem:[%s1 + $0x3c] sm:$0xf]
  %v54 = vunpack.c.l.b16 %v22
  %v55 = vunpack.c.l.b16 %v23
  %v56 = vunpack.c.l.b16 %v24
  %v57 = vunpack.c.l.b16 %v25
  %v58 = vunpack.c.l.b16 %v26
  %v59 = vunpack.c.l.b16 %v27
  %v60 = vunpack.c.l.b16 %v28
  %v61 = vunpack.c.l.b16 %v29
  %v62 = vunpack.c.l.b16 %v30
  %v63 = vunpack.c.l.b16 %v31
  %v64 = vunpack.c.l.b16 %v32
  %v65 = vunpack.c.l.b16 %v33
  %v66 = vunpack.c.l.b16 %v34
  %v67 = vunpack.c.l.b16 %v35
  %v68 = vunpack.c.l.b16 %v36
  %v69 = vunpack.c.l.b16 %v37
  %v70 = vpack.c.b16 %v55, %v54
  %v71 = vpack.c.b16 %v57, %v56
  %v72 = vpack.c.b16 %v59, %v58
  %v73 = vpack.c.b16 %v61, %v60
  %v74 = vpack.c.b16 %v63, %v62
  %v75 = vpack.c.b16 %v65, %v64
  %v76 = vpack.c.b16 %v67, %v66
  %v77 = vpack.c.b16 %v69, %v68
  %86 = vmatprep.subr.bf16.mxu0 0
  %87 = vmatpush1.bf16.msra.mxu0 %v77
  %88 = vmatprep.subr.bf16.mxu0 0
  %89 = vmatpush1.bf16.msra.mxu0 %v76
  %90 = vmatprep.subr.bf16.mxu0 0
  %91 = vmatpush1.bf16.msra.mxu0 %v75
  %92 = vmatprep.subr.bf16.mxu0 0
  %93 = vmatpush1.bf16.msra.mxu0 %v74
  %94 = vmatprep.subr.bf16.mxu0 0
  %95 = vmatpush1.bf16.msra.mxu0 %v73
  %96 = vmatprep.subr.bf16.mxu0 0
  %97 = vmatpush1.bf16.msra.mxu0 %v72
  %98 = vmatprep.subr.bf16.mxu0 0
  %99 = vmatpush1.bf16.msra.mxu0 %v71
  %100 = vmatprep.subr.bf16.mxu0 0
  %101 = vmatpush1.bf16.msra.mxu0 %v70
  %102 = vmatprep.subr.bf16.mxu0 0
  %103 = vmatpush2.bf16.msra.mxu0 0
  %104 = vmatprep.subr.bf16.mxu0 0
  %105 = vmatpush2.bf16.msra.mxu0 0
  %106 = vmatprep.subr.bf16.mxu0 0
  %107 = vmatpush2.bf16.msra.mxu0 0
  %108 = vmatprep.subr.bf16.mxu0 0
  %109 = vmatpush2.bf16.msra.mxu0 0
  %110 = vmatprep.subr.bf16.mxu0 0
  %111 = vmatpush2.bf16.msra.mxu0 0
  %112 = vmatprep.subr.bf16.mxu0 0
  %113 = vmatpush2.bf16.msra.mxu0 0
  %114 = vmatprep.subr.bf16.mxu0 0
  %115 = vmatpush2.bf16.msra.mxu0 0
  %116 = vmatprep.subr.bf16.mxu0 0
  %117 = vmatpush2.bf16.msra.mxu0 0
  %118 = vmatprep.mubr.bf16.mxu0 0
  %119 = vmatmul.mubr.bf16.gmra.mxu0 %v21
  %v120 = vpop.f32.mrf.mxu0
  %v121 = vadd.f32 0.0, %v120
  %v122 = vpop.f32.mrf.mxu0
  %v123 = vpop.f32.mrf.mxu0
  %v124 = vpop.f32.mrf.mxu0
  %125 = vdwg.mxu0
  %v126 = vadd.f32 %v20, %v121
  %127 = vst [vmem:[#allocation2] sm:$0x3] %v126
  // Predicated region
  $region18: #{_lambda_.13} parent=0 // pred_check
    %p128 = pneg %p15
  $region19: #{_lambda_.13} parent=0 // pred_check_branch
    %130 = sbr.rel (%p128) target = $region21
  $region20: #{_lambda_.13} parent=0 // pred_region
    %v131 = vld [vmem:[#allocation2] sm:$0x3]
    %v132 = vld [vmem:[%s2] sm:$0x1]
    %v134 = vlaneseq
    %v135 = vshrl.u32 %v134, 7
    %v136 = vsub.s32 0, %v135
    %v137 = vrot.slane %v132, %v136
    %v139 = vadd.f32 %v131, %v137
    %140 = vst [vmem:[%s3] sm:$0x3] %v139
  $region21: #{_lambda_.13} parent=0 // pred_fallthru
    _
  // Predicated region
  $region22: #{_lambda_.13} parent=0 // pred_check
    _
  $region23: #{_lambda_.13} parent=0 // pred_check_branch
    %142 = sbr.rel (0) target = $region25
  $region24: #{_lambda_.13} parent=0 // pred_region
    _
  $region25: #{_lambda_.13} parent=0 // pred_fallthru
    _
  // Predicated region
  $region26: #{_lambda_.13} parent=0 // pred_check
    _
  $region27: #{_lambda_.13} parent=0 // pred_check_branch
    %144 = sbr.rel (0) target = $region29
  $region28: #{_lambda_.13} parent=0 // pred_region
    _
  $region29: #{_lambda_.13} parent=0 // pred_fallthru
    _

// kernel: _lambda_.11
$region0: #{_lambda_.11}
  #allocation0 [shape = 'u32[]', space=smem, size = 0x4, offset = 0x4, fixed_abs, tag = 'smem constant byte address 0x4 - core index']
  #allocation1 [shape = 'u32[144,128]{1,0:T(1,128)}', space=vmem, size = 0x12000, scoped, tag = 'internal scratch']
  %s0 = inlined_call_operand.vmem [shape: bf16[8,256], index: 0, kind: input, shape index: {}]
  %s1 = inlined_call_operand.vmem [shape: bf16[256,128], index: 1, kind: input, shape index: {}]
  %s2 = inlined_call_operand.vmem [shape: bf16[8,32], index: 2, kind: output, shape index: {0}]
  %s3 = inlined_call_operand.vmem [shape: f32[1,2,32], index: 3, kind: output, shape index: {1}]
  %4 = xla_tuple %s2, %s3
  %s5 = sld [smem:[#allocation0]]
  $region26: #{_lambda_.11} parent=0
    _
  %s7 = ssub.s32 1, %s5
  %s8 = scalar_select 0, %s7, %s5
  // Predicated region
  $region2: #{_lambda_.11} parent=0 // pred_check
    _
  $region3: #{_lambda_.11} parent=0 // pred_check_branch
    %10 = sbr.rel (0) target = $region5
  $region4: #{_lambda_.11} parent=0 // pred_region
    _
  $region5: #{_lambda_.11} parent=0 // pred_fallthru
    _
  // Predicated region
  $region6: #{_lambda_.11} parent=0 // pred_check
    _
  $region7: #{_lambda_.11} parent=0 // pred_check_branch
    %12 = sbr.rel (0) target = $region9
  $region8: #{_lambda_.11} parent=0 // pred_region
    _
  $region9: #{_lambda_.11} parent=0 // pred_fallthru
    _
  %v14 = vld [vmem:[%s0] sm:$0xff]
  %v15 = vld [vmem:[%s1] sm:$0xf]
  %v16 = vld [vmem:[%s1 + $0x4] sm:$0xf]
  %v17 = vld [vmem:[%s1 + $0x8] sm:$0xf]
  %v18 = vld [vmem:[%s1 + $0xc] sm:$0xf]
  %v19 = vld [vmem:[%s1 + $0x10] sm:$0xf]
  %v20 = vld [vmem:[%s1 + $0x14] sm:$0xf]
  %v21 = vld [vmem:[%s1 + $0x18] sm:$0xf]
  %v22 = vld [vmem:[%s1 + $0x1c] sm:$0xf]
  %v23 = vld [vmem:[%s1 + $0x20] sm:$0xf]
  %v24 = vld [vmem:[%s1 + $0x24] sm:$0xf]
  %v25 = vld [vmem:[%s1 + $0x28] sm:$0xf]
  %v26 = vld [vmem:[%s1 + $0x2c] sm:$0xf]
  %v27 = vld [vmem:[%s1 + $0x30] sm:$0xf]
  %v28 = vld [vmem:[%s1 + $0x34] sm:$0xf]
  %v29 = vld [vmem:[%s1 + $0x38] sm:$0xf]
  %v30 = vld [vmem:[%s1 + $0x3c] sm:$0xf]
  %v31 = vld [vmem:[%s1 + $0x40] sm:$0xf]
  %v32 = vld [vmem:[%s1 + $0x44] sm:$0xf]
  %v33 = vld [vmem:[%s1 + $0x48] sm:$0xf]
  %v34 = vld [vmem:[%s1 + $0x4c] sm:$0xf]
  %v35 = vld [vmem:[%s1 + $0x50] sm:$0xf]
  %v36 = vld [vmem:[%s1 + $0x54] sm:$0xf]
  %v37 = vld [vmem:[%s1 + $0x58] sm:$0xf]
  %v38 = vld [vmem:[%s1 + $0x5c] sm:$0xf]
  %v39 = vld [vmem:[%s1 + $0x60] sm:$0xf]
  %v40 = vld [vmem:[%s1 + $0x64] sm:$0xf]
  %v41 = vld [vmem:[%s1 + $0x68] sm:$0xf]
  %v42 = vld [vmem:[%s1 + $0x6c] sm:$0xf]
  %v43 = vld [vmem:[%s1 + $0x70] sm:$0xf]
  %v44 = vld [vmem:[%s1 + $0x74] sm:$0xf]
  %v45 = vld [vmem:[%s1 + $0x78] sm:$0xf]
  %v46 = vld [vmem:[%s1 + $0x7c] sm:$0xf]
  %v48 = vunpack.c.l.b16 %v14
  %v49 = vunpack.c.h.b16 %v14
  %v50 = vpack.c.b16 %v48, %v48
  %v51 = vpack.c.b16 %v49, %v49
  %v86 = vunpack.c.l.b16 %v15
  %v87 = vunpack.c.l.b16 %v16
  %v88 = vunpack.c.l.b16 %v17
  %v89 = vunpack.c.l.b16 %v18
  %v90 = vunpack.c.l.b16 %v19
  %v91 = vunpack.c.l.b16 %v20
  %v92 = vunpack.c.l.b16 %v21
  %v93 = vunpack.c.l.b16 %v22
  %v94 = vunpack.c.l.b16 %v23
  %v95 = vunpack.c.l.b16 %v24
  %v96 = vunpack.c.l.b16 %v25
  %v97 = vunpack.c.l.b16 %v26
  %v98 = vunpack.c.l.b16 %v27
  %v99 = vunpack.c.l.b16 %v28
  %v100 = vunpack.c.l.b16 %v29
  %v101 = vunpack.c.l.b16 %v30
  %v102 = vunpack.c.l.b16 %v31
  %v103 = vunpack.c.l.b16 %v32
  %v104 = vunpack.c.l.b16 %v33
  %v105 = vunpack.c.l.b16 %v34
  %v106 = vunpack.c.l.b16 %v35
  %v107 = vunpack.c.l.b16 %v36
  %v108 = vunpack.c.l.b16 %v37
  %v109 = vunpack.c.l.b16 %v38
  %v110 = vunpack.c.l.b16 %v39
  %v111 = vunpack.c.l.b16 %v40
  %v112 = vunpack.c.l.b16 %v41
  %v113 = vunpack.c.l.b16 %v42
  %v114 = vunpack.c.l.b16 %v43
  %v115 = vunpack.c.l.b16 %v44
  %v116 = vunpack.c.l.b16 %v45
  %v117 = vunpack.c.l.b16 %v46
  %v118 = vpack.c.b16 %v87, %v86
  %v119 = vpack.c.b16 %v89, %v88
  %v120 = vpack.c.b16 %v91, %v90
  %v121 = vpack.c.b16 %v93, %v92
  %v122 = vpack.c.b16 %v95, %v94
  %v123 = vpack.c.b16 %v97, %v96
  %v124 = vpack.c.b16 %v99, %v98
  %v125 = vpack.c.b16 %v101, %v100
  %v126 = vpack.c.b16 %v103, %v102
  %v127 = vpack.c.b16 %v105, %v104
  %v128 = vpack.c.b16 %v107, %v106
  %v129 = vpack.c.b16 %v109, %v108
  %v130 = vpack.c.b16 %v111, %v110
  %v131 = vpack.c.b16 %v113, %v112
  %v132 = vpack.c.b16 %v115, %v114
  %v133 = vpack.c.b16 %v117, %v116
  %150 = vmatprep.subr.bf16.mxu0 0
  %151 = vmatpush1.bf16.msra.mxu0 %v125
  %152 = vmatprep.subr.bf16.mxu0 0
  %153 = vmatpush1.bf16.msra.mxu0 %v124
  %154 = vmatprep.subr.bf16.mxu0 0
  %155 = vmatpush1.bf16.msra.mxu0 %v123
  %156 = vmatprep.subr.bf16.mxu0 0
  %157 = vmatpush1.bf16.msra.mxu0 %v122
  %158 = vmatprep.subr.bf16.mxu0 0
  %159 = vmatpush1.bf16.msra.mxu0 %v121
  %160 = vmatprep.subr.bf16.mxu0 0
  %161 = vmatpush1.bf16.msra.mxu0 %v120
  %162 = vmatprep.subr.bf16.mxu0 0
  %163 = vmatpush1.bf16.msra.mxu0 %v119
  %164 = vmatprep.subr.bf16.mxu0 0
  %165 = vmatpush1.bf16.msra.mxu0 %v118
  %166 = vmatprep.subr.bf16.mxu0 0
  %167 = vmatpush2.bf16.msra.mxu0 %v133
  %168 = vmatprep.subr.bf16.mxu0 0
  %169 = vmatpush2.bf16.msra.mxu0 %v132
  %170 = vmatprep.subr.bf16.mxu0 0
  %171 = vmatpush2.bf16.msra.mxu0 %v131
  %172 = vmatprep.subr.bf16.mxu0 0
  %173 = vmatpush2.bf16.msra.mxu0 %v130
  %174 = vmatprep.subr.bf16.mxu0 0
  %175 = vmatpush2.bf16.msra.mxu0 %v129
  %176 = vmatprep.subr.bf16.mxu0 0
  %177 = vmatpush2.bf16.msra.mxu0 %v128
  %178 = vmatprep.subr.bf16.mxu0 0
  %179 = vmatpush2.bf16.msra.mxu0 %v127
  %180 = vmatprep.subr.bf16.mxu0 0
  %181 = vmatpush2.bf16.msra.mxu0 %v126
  %182 = vmatprep.mubr.bf16.mxu0 %v51
  %183 = vmatmul.mubr.bf16.gmra.mxu0 %v50
  %v184 = vpop.f32.mrf.mxu0
  %v185 = vadd.f32 0.0, %v184
  %v186 = vpop.f32.mrf.mxu0
  %v187 = vpop.f32.mrf.mxu0
  %v188 = vpop.f32.mrf.mxu0
  %189 = vdwg.mxu0
  %v190 = vmul.f32 %v185, %v185
  %vm191 = vcmask 261120
  %v192 = vsel %vm191, %v185, 0.0
  %v193 = vrot.slane %v192, 4
  %v194 = vadd.f32 %v192, %v193
  %v195 = vrot.slane %v194, 2
  %v196 = vadd.f32 %v194, %v195
  %v197 = vrot.slane %v196, 1
  %v198 = vadd.f32 %v196, %v197
  %vm199 = vcmask 253952
  %200 = vst.msk [vmem:[%s3] sm:$0x1] %vm199, %v198
  %v201 = vsel %vm191, %v190, 0.0
  %v202 = vrot.slane %v201, 4
  %v203 = vadd.f32 %v201, %v202
  %v204 = vrot.slane %v203, 2
  %v205 = vadd.f32 %v203, %v204
  %v206 = vrot.slane %v205, 1
  %v207 = vadd.f32 %v205, %v206
  %208 = vst.msk [vmem:[%s3 + $0x1] sm:$0x1] %vm199, %v207
  %v209 = vpack.c.bf16 %v185, %v185
  %vm210 = vcmask 257024
  %211 = vst.msk [vmem:[%s2] sm:$0xf] %vm210, %v209
  // Predicated region
  $region10: #{_lambda_.11} parent=0 // pred_check
    _
  $region11: #{_lambda_.11} parent=0 // pred_check_branch
    %213 = sbr.rel (0) target = $region13
  $region12: #{_lambda_.11} parent=0 // pred_region
    _
  $region13: #{_lambda_.11} parent=0 // pred_fallthru
    _
  // Predicated region
  $region14: #{_lambda_.11} parent=0 // pred_check
    _
  $region15: #{_lambda_.11} parent=0 // pred_check_branch
    %215 = sbr.rel (0) target = $region17
  $region16: #{_lambda_.11} parent=0 // pred_region
    _
  $region17: #{_lambda_.11} parent=0 // pred_fallthru
    _
  // Predicated region
  $region18: #{_lambda_.11} parent=0 // pred_check
    _
  $region19: #{_lambda_.11} parent=0 // pred_check_branch
    %217 = sbr.rel (0) target = $region21
  $region20: #{_lambda_.11} parent=0 // pred_region
    _
  $region21: #{_lambda_.11} parent=0 // pred_fallthru
    _
  // Predicated region
  $region22: #{_lambda_.11} parent=0 // pred_check
    _
  $region23: #{_lambda_.11} parent=0 // pred_check_branch
    %219 = sbr.rel (0) target = $region25
  $region24: #{_lambda_.11} parent=0 // pred_region
    _
  $region25: #{_lambda_.11} parent=0 // pred_fallthru
    _

</llo_original>
